<compile_context>
chip_gen: v7x
topology: tpu7x:2x2x1
jax: 0.10.0
libtpu: 0.0.40
codegen_flags: <defaults>
</compile_context>

<pallas_src>
import jax
import jax.numpy as jnp
from jax.experimental import pallas as pl
from jax.experimental.pallas import tpu as pltpu

# ----- module hyper-parameters (module defaults, dim=32) -----
DIM = 32                        # input feature dim
D_MODEL = 2 * DIM               # mamba d_model = 64
D_STATE = 16
D_CONV = 4
NUM_LAYERS = 2
OUTPUT_DIM = 256
EXPAND = 2
D_INNER = EXPAND * D_MODEL      # 128
DT_RANK = -(-D_MODEL // 16)     # ceil(d_model/16) = 4 ("auto")
LN_EPS = 1e-5

GATE_PAD = 128                  # lane-dense gate output width (sliced to 2)

# ----- packed small-parameter slab layout -----
SLAB_COLS = 256
_ROW_B_IA, _ROW_G_IA, _ROW_BE_IA = 0, 1, 2
_ROW_B_TA, _ROW_G_TA, _ROW_BE_TA = 3, 4, 5
_ROW_LAYER_BASE = 6             # per layer: conv_w, conv_b, b_dt, d_par, ln_g, ln_b
_ROW_B_G1 = _ROW_LAYER_BASE + 6 * NUM_LAYERS   # 18
_ROW_W_DIFF = _ROW_B_G1 + 1
_ROW_B_DIFF = _ROW_B_G1 + 2
_ROW_B_FC = _ROW_B_G1 + 3
_ROW_G_NF = _ROW_B_G1 + 4
_ROW_B_NF = _ROW_B_G1 + 5
SLAB_ROWS = _ROW_B_NF + 1       # 24 (multiple of 8)


def _round_up(n, m):
    return ((n + m - 1) // m) * m


def _mm(a, w):
    return jnp.dot(a, w, preferred_element_type=jnp.float32)


def _ln(x, g, b):
    mu = jnp.mean(x, axis=-1, keepdims=True)
    xc = x - mu
    var = jnp.mean(xc * xc, axis=-1, keepdims=True)
    return xc * jax.lax.rsqrt(var + LN_EPS) * g + b


# ---------------------------------------------------------------------------
# Pallas kernel: one batch tile per grid step, all (folded) weights resident
# ---------------------------------------------------------------------------
def fusion_kernel(*refs):
    it = iter(refs)
    img_ref = next(it)
    txt_ref = next(it)
    w_ia = next(it)[...]
    w_ta = next(it)[...]
    layer_w = [tuple(next(it)[...] for _ in range(6)) for _ in range(NUM_LAYERS)]
    w_g1 = next(it)[...]
    w_fc = next(it)[...]
    slab_ref = next(it)
    fused_ref = next(it)
    gate_ref = next(it)

    def vec(row, n):
        return slab_ref[row:row + 1, :n]          # (1, n) broadcast against (tile_b, n)

    img = img_ref[...]
    txt = txt_ref[...]

    # alignment blocks: Linear -> ReLU -> LayerNorm
    img_a = _ln(jnp.maximum(_mm(img, w_ia) + vec(_ROW_B_IA, DIM), 0.0),
                vec(_ROW_G_IA, DIM), vec(_ROW_BE_IA, DIM))
    txt_a = _ln(jnp.maximum(_mm(txt, w_ta) + vec(_ROW_B_TA, DIM), 0.0),
                vec(_ROW_G_TA, DIM), vec(_ROW_BE_TA, DIM))
    x = jnp.concatenate([img_a, txt_a], axis=-1)   # [tile_b, d_model]

    # Mamba layers (seq_len == 1 collapse) + residual + LayerNorm
    # TODO(synk): A_log ([d_inner, d_state]) is a real Mamba parameter but with
    # seq_len == 1 and h0 == 0 it cannot influence the output, so it is omitted.
    for l in range(NUM_LAYERS):
        w_in_x, w_in_z, w_dt_eff, w_b, w_c, w_out = layer_w[l]
        base = _ROW_LAYER_BASE + 6 * l
        conv_w = vec(base + 0, D_INNER)
        conv_b = vec(base + 1, D_INNER)
        b_dt = vec(base + 2, D_INNER)
        d_par = vec(base + 3, D_INNER)
        ln_g = vec(base + 4, D_MODEL)
        ln_b = vec(base + 5, D_MODEL)

        residual = x
        xi = _mm(x, w_in_x)                                  # in_proj, x branch
        z = _mm(x, w_in_z)                                   # in_proj, gate branch
        xc = xi * conv_w + conv_b                            # depthwise conv, L=1
        xs = xc * jax.nn.sigmoid(xc)                         # SiLU
        dt = jax.nn.softplus(_mm(xs, w_dt_eff) + b_dt)       # dt_proj folded into x_proj
        bm = _mm(xs, w_b)                                    # [tile_b, d_state]
        cm = _mm(xs, w_c)                                    # [tile_b, d_state]
        bc = jnp.sum(bm * cm, axis=-1, keepdims=True)        # B·C, [tile_b, 1]
        y = (dt * bc + d_par) * xs                           # collapsed SSM (h0=0)
        y = y * (z * jax.nn.sigmoid(z))                      # gate
        m_out = _mm(y, w_out)                                # out_proj
        x = _ln(m_out + residual, ln_g, ln_b)

    m = x                                                    # mamba_output

    # gate path: attention(v/out proj) + gate Linear1 folded into w_g1 host-side
    g = jnp.maximum(_mm(m, w_g1) + vec(_ROW_B_G1, DIM), 0.0)
    d = (jnp.sum(g * vec(_ROW_W_DIFF, DIM), axis=-1, keepdims=True)
         + slab_ref[_ROW_B_DIFF:_ROW_B_DIFF + 1, 0:1])       # logit0 - logit1
    p0 = jax.nn.sigmoid(d)                                   # == softmax over 2 classes
    lane = jax.lax.broadcasted_iota(jnp.int32, gate_ref.shape, 1)
    gate_ref[...] = jnp.where(lane == 0, p0,
                              jnp.where(lane == 1, 1.0 - p0, 0.0))

    # fused output: fc(mamba_output) -> LayerNorm  (gated mix is dead code)
    fused = _ln(_mm(m, w_fc) + vec(_ROW_B_FC, OUTPUT_DIM),
                vec(_ROW_G_NF, OUTPUT_DIM), vec(_ROW_B_NF, OUTPUT_DIM))
    fused_ref[...] = fused.astype(fused_ref.dtype)


# ---------------------------------------------------------------------------
# host-side parameter folding / packing
# ---------------------------------------------------------------------------
def prepare_kernel_params(p):
    f32 = jnp.float32

    layer_weights = []
    for lyr in p['layers']:
        w_in = jnp.asarray(lyr['w_in'], f32)
        w_xp = jnp.asarray(lyr['w_xp'], f32)
        w_in_x = w_in[:, :D_INNER]
        w_in_z = w_in[:, D_INNER:]
        w_dt_eff = w_xp[:, :DT_RANK] @ jnp.asarray(lyr['w_dt'], f32)   # [d_inner, d_inner]
        w_b = w_xp[:, DT_RANK:DT_RANK + D_STATE]
        w_c = w_xp[:, DT_RANK + D_STATE:]
        layer_weights.append((w_in_x, w_in_z, w_dt_eff, w_b, w_c,
                              jnp.asarray(lyr['w_out'], f32)))

    # attention (seq_len==1) + first gate Linear, folded: m @ (wv@wo@wg1) + b
    w_attn = p['wv'] @ p['wo']
    b_attn = p['bv'] @ p['wo'] + p['bo']
    w_g1_eff = w_attn @ p['wg1']                       # [d_model, dim]
    b_g1_eff = b_attn @ p['wg1'] + p['bg1']            # [dim]

    # 2-class softmax as sigmoid of a logit difference
    w_diff = p['wg2'][:, 0] - p['wg2'][:, 1]           # [dim]
    b_diff = p['bg2'][0] - p['bg2'][1]                 # scalar

    def row(v):
        v = jnp.asarray(v, f32).reshape(-1)
        return jnp.pad(v, (0, SLAB_COLS - v.shape[0]))

    rows = [row(p['b_ia']), row(p['g_ia']), row(p['be_ia']),
            row(p['b_ta']), row(p['g_ta']), row(p['be_ta'])]
    for lyr in p['layers']:
        rows += [row(lyr['conv_w']), row(lyr['conv_b']), row(lyr['b_dt']),
                 row(lyr['d_par']), row(lyr['ln_g']), row(lyr['ln_b'])]
    rows += [row(b_g1_eff), row(w_diff), row(jnp.array([b_diff], f32)),
             row(p['bfc']), row(p['gnf']), row(p['bnf'])]
    slab = jnp.stack(rows).astype(f32)                 # [SLAB_ROWS, SLAB_COLS]

    weights = [jnp.asarray(p['w_ia'], f32), jnp.asarray(p['w_ta'], f32)]
    for lw in layer_weights:
        weights += list(lw)
    weights += [w_g1_eff.astype(f32), jnp.asarray(p['wfc'], f32), slab]
    return weights


# ---------------------------------------------------------------------------
# wrapper: batch-gridded pallas_call
# ---------------------------------------------------------------------------
def enhanced_mamba_fusion(image_features, text_features, params, tile_b=256):
    B = image_features.shape[0]
    # tile sized for v7x's 64 MiB VMEM with big headroom; shrink for tiny batches
    tile_b = max(8, min(tile_b, _round_up(B, 8)))
    b_pad = _round_up(B, tile_b)

    img = image_features.astype(jnp.float32)
    txt = text_features.astype(jnp.float32)
    if b_pad != B:
        img = jnp.pad(img, ((0, b_pad - B), (0, 0)))
        txt = jnp.pad(txt, ((0, b_pad - B), (0, 0)))

    weights = prepare_kernel_params(params)

    def batch_spec(f):
        return pl.BlockSpec((tile_b, f), lambda i: (i, 0))

    def const_spec(shape):
        return pl.BlockSpec(shape, lambda i: (0,) * len(shape))

    in_specs = ([batch_spec(DIM), batch_spec(DIM)]
                + [const_spec(w.shape) for w in weights])
    out_specs = (batch_spec(OUTPUT_DIM), batch_spec(GATE_PAD))

    fused, gate_pad = pl.pallas_call(
        fusion_kernel,
        out_shape=(
            jax.ShapeDtypeStruct((b_pad, OUTPUT_DIM), jnp.float32),
            jax.ShapeDtypeStruct((b_pad, GATE_PAD), jnp.float32),
        ),
        grid=(b_pad // tile_b,),
        in_specs=in_specs,
        out_specs=out_specs,
        compiler_params=pltpu.CompilerParams(
            dimension_semantics=("parallel",)),
    )(img, txt, *weights)

    return fused[:B], gate_pad[:B, :2]


# ---------------------------------------------------------------------------
# pure-JAX reference (unfolded params, original structure) for correctness
# ---------------------------------------------------------------------------
def reference_forward(img, txt, p):
    def ln(x, g, b):
        mu = jnp.mean(x, axis=-1, keepdims=True)
        var = jnp.mean((x - mu) ** 2, axis=-1, keepdims=True)
        return (x - mu) / jnp.sqrt(var + LN_EPS) * g + b

    img_a = ln(jax.nn.relu(img @ p['w_ia'] + p['b_ia']), p['g_ia'], p['be_ia'])
    txt_a = ln(jax.nn.relu(txt @ p['w_ta'] + p['b_ta']), p['g_ta'], p['be_ta'])
    x = jnp.concatenate([img_a, txt_a], axis=-1)

    for lyr in p['layers']:
        residual = x
        xz = x @ lyr['w_in']
        xi, z = xz[:, :D_INNER], xz[:, D_INNER:]
        xc = xi * lyr['conv_w'] + lyr['conv_b']
        xs = xc * jax.nn.sigmoid(xc)
        x_dbl = xs @ lyr['w_xp']
        dt_in = x_dbl[:, :DT_RANK]
        bm = x_dbl[:, DT_RANK:DT_RANK + D_STATE]
        cm = x_dbl[:, DT_RANK + D_STATE:]
        dt = jax.nn.softplus(dt_in @ lyr['w_dt'] + lyr['b_dt'])
        bc = jnp.sum(bm * cm, axis=-1, keepdims=True)
        y = dt * xs * bc + lyr['d_par'] * xs
        y = y * (z * jax.nn.sigmoid(z))
        x = ln(y @ lyr['w_out'] + residual, lyr['ln_g'], lyr['ln_b'])

    m = x
    attn = (m @ p['wv'] + p['bv']) @ p['wo'] + p['bo']
    g = jax.nn.relu(attn @ p['wg1'] + p['bg1'])
    logits = g @ p['wg2'] + p['bg2']
    gate_w = jax.nn.softmax(logits, axis=-1)
    fused = ln(m @ p['wfc'] + p['bfc'], p['gnf'], p['bnf'])
    return fused, gate_w


# ---------------------------------------------------------------------------
# deterministic synthetic parameter init (matches the module's shapes)
# ---------------------------------------------------------------------------
def init_params(key):
    keys = iter(jax.random.split(key, 64))

    def w(shape, scale=0.1):
        return scale * jax.random.normal(next(keys), shape, jnp.float32)

    ones = lambda n: jnp.ones((n,), jnp.float32)
    zeros = lambda n: jnp.zeros((n,), jnp.float32)

    p = {
        'w_ia': w((DIM, DIM)), 'b_ia': w((DIM,), 0.01), 'g_ia': ones(DIM), 'be_ia': zeros(DIM),
        'w_ta': w((DIM, DIM)), 'b_ta': w((DIM,), 0.01), 'g_ta': ones(DIM), 'be_ta': zeros(DIM),
        'wv': w((D_MODEL, D_MODEL)), 'bv': w((D_MODEL,), 0.01),
        'wo': w((D_MODEL, D_MODEL)), 'bo': w((D_MODEL,), 0.01),
        'wg1': w((D_MODEL, DIM)), 'bg1': w((DIM,), 0.01),
        'wg2': w((DIM, 2)), 'bg2': w((2,), 0.01),
        'wfc': w((D_MODEL, OUTPUT_DIM)), 'bfc': w((OUTPUT_DIM,), 0.01),
        'gnf': ones(OUTPUT_DIM), 'bnf': zeros(OUTPUT_DIM),
        'layers': [],
    }
    for _ in range(NUM_LAYERS):
        p['layers'].append({
            'w_in': w((D_MODEL, 2 * D_INNER)),          # in_proj (bias=False)
            'conv_w': w((D_INNER,)),                    # depthwise conv, last causal tap
            'conv_b': w((D_INNER,), 0.01),
            'w_xp': w((D_INNER, DT_RANK + 2 * D_STATE)),  # x_proj (bias=False)
            'w_dt': w((DT_RANK, D_INNER)),
            'b_dt': w((D_INNER,), 0.01),
            'd_par': ones(D_INNER),                     # D skip param (init 1)
            'w_out': w((D_INNER, D_MODEL)),             # out_proj (bias=False)
            'ln_g': ones(D_MODEL), 'ln_b': zeros(D_MODEL),
        })
    return p


if __name__ == "__main__":
    key = jax.random.PRNGKey(0)
    k_img, k_txt, k_par = jax.random.split(key, 3)

    B = 2
    image_features = jax.random.normal(k_img, (B, DIM), jnp.float32)
    text_features = jax.random.normal(k_txt, (B, DIM), jnp.float32)
    params = init_params(k_par)

    fused, gate_w = enhanced_mamba_fusion(image_features, text_features, params)
    jax.block_until_ready((fused, gate_w))

    ref_fused, ref_gate = reference_forward(image_features, text_features, params)
    assert fused.shape == (B, OUTPUT_DIM) and gate_w.shape == (B, 2)
    assert jnp.allclose(fused, ref_fused, rtol=2e-3, atol=2e-3)
    assert jnp.allclose(gate_w, ref_gate, rtol=2e-3, atol=2e-3)

    print("KERNEL_OK")
</pallas_src>

<mosaic_0001>
module attributes {stable_mosaic.version = 11 : i64} {
  func.func @fusion_kernel(%arg0: i32, %arg1: memref<8x32xf32, #tpu.memory_space<vmem>>, %arg2: memref<8x32xf32, #tpu.memory_space<vmem>>, %arg3: memref<32x32xf32, #tpu.memory_space<vmem>>, %arg4: memref<32x32xf32, #tpu.memory_space<vmem>>, %arg5: memref<64x128xf32, #tpu.memory_space<vmem>>, %arg6: memref<64x128xf32, #tpu.memory_space<vmem>>, %arg7: memref<128x128xf32, #tpu.memory_space<vmem>>, %arg8: memref<128x16xf32, #tpu.memory_space<vmem>>, %arg9: memref<128x16xf32, #tpu.memory_space<vmem>>, %arg10: memref<128x64xf32, #tpu.memory_space<vmem>>, %arg11: memref<64x128xf32, #tpu.memory_space<vmem>>, %arg12: memref<64x128xf32, #tpu.memory_space<vmem>>, %arg13: memref<128x128xf32, #tpu.memory_space<vmem>>, %arg14: memref<128x16xf32, #tpu.memory_space<vmem>>, %arg15: memref<128x16xf32, #tpu.memory_space<vmem>>, %arg16: memref<128x64xf32, #tpu.memory_space<vmem>>, %arg17: memref<64x32xf32, #tpu.memory_space<vmem>>, %arg18: memref<64x256xf32, #tpu.memory_space<vmem>>, %arg19: memref<24x256xf32, #tpu.memory_space<vmem>>, %arg20: memref<8x256xf32, #tpu.memory_space<vmem>>, %arg21: memref<8x128xf32, #tpu.memory_space<vmem>>) attributes {dimension_semantics = [#tpu.dimension_semantics<parallel>], iteration_bounds = array<i64: 1>, scalar_prefetch = 0 : i64, scratch_operands = 0 : i64, tpu.core_type = #tpu.core_type<tc>, window_params = [{transform_indices = @transform_0, window_bounds = array<i64: 8, 32>}, {transform_indices = @transform_1, window_bounds = array<i64: 8, 32>}, {pipeline_mode = #tpu.pipeline_mode<synchronous>, transform_indices = @transform_2, window_bounds = array<i64: 32, 32>}, {pipeline_mode = #tpu.pipeline_mode<synchronous>, transform_indices = @transform_3, window_bounds = array<i64: 32, 32>}, {pipeline_mode = #tpu.pipeline_mode<synchronous>, transform_indices = @transform_4, window_bounds = array<i64: 64, 128>}, {pipeline_mode = #tpu.pipeline_mode<synchronous>, transform_indices = @transform_5, window_bounds = array<i64: 64, 128>}, {pipeline_mode = #tpu.pipeline_mode<synchronous>, transform_indices = @transform_6, window_bounds = array<i64: 128, 128>}, {pipeline_mode = #tpu.pipeline_mode<synchronous>, transform_indices = @transform_7, window_bounds = array<i64: 128, 16>}, {pipeline_mode = #tpu.pipeline_mode<synchronous>, transform_indices = @transform_8, window_bounds = array<i64: 128, 16>}, {pipeline_mode = #tpu.pipeline_mode<synchronous>, transform_indices = @transform_9, window_bounds = array<i64: 128, 64>}, {pipeline_mode = #tpu.pipeline_mode<synchronous>, transform_indices = @transform_10, window_bounds = array<i64: 64, 128>}, {pipeline_mode = #tpu.pipeline_mode<synchronous>, transform_indices = @transform_11, window_bounds = array<i64: 64, 128>}, {pipeline_mode = #tpu.pipeline_mode<synchronous>, transform_indices = @transform_12, window_bounds = array<i64: 128, 128>}, {pipeline_mode = #tpu.pipeline_mode<synchronous>, transform_indices = @transform_13, window_bounds = array<i64: 128, 16>}, {pipeline_mode = #tpu.pipeline_mode<synchronous>, transform_indices = @transform_14, window_bounds = array<i64: 128, 16>}, {pipeline_mode = #tpu.pipeline_mode<synchronous>, transform_indices = @transform_15, window_bounds = array<i64: 128, 64>}, {pipeline_mode = #tpu.pipeline_mode<synchronous>, transform_indices = @transform_16, window_bounds = array<i64: 64, 32>}, {pipeline_mode = #tpu.pipeline_mode<synchronous>, transform_indices = @transform_17, window_bounds = array<i64: 64, 256>}, {pipeline_mode = #tpu.pipeline_mode<synchronous>, transform_indices = @transform_18, window_bounds = array<i64: 24, 256>}, {transform_indices = @transform_19, window_bounds = array<i64: 8, 256>}, {transform_indices = @transform_20, window_bounds = array<i64: 8, 128>}]} {
    %c0 = arith.constant 0 : index
    %c0_0 = arith.constant 0 : index
    %0 = vector.load %arg3[%c0, %c0_0] : memref<32x32xf32, #tpu.memory_space<vmem>>, vector<32x32xf32>
    %c0_1 = arith.constant 0 : index
    %c0_2 = arith.constant 0 : index
    %1 = vector.load %arg4[%c0_1, %c0_2] : memref<32x32xf32, #tpu.memory_space<vmem>>, vector<32x32xf32>
    %c0_3 = arith.constant 0 : index
    %c0_4 = arith.constant 0 : index
    %2 = vector.load %arg5[%c0_3, %c0_4] : memref<64x128xf32, #tpu.memory_space<vmem>>, vector<64x128xf32>
    %c0_5 = arith.constant 0 : index
    %c0_6 = arith.constant 0 : index
    %3 = vector.load %arg6[%c0_5, %c0_6] : memref<64x128xf32, #tpu.memory_space<vmem>>, vector<64x128xf32>
    %c0_7 = arith.constant 0 : index
    %c0_8 = arith.constant 0 : index
    %4 = vector.load %arg7[%c0_7, %c0_8] : memref<128x128xf32, #tpu.memory_space<vmem>>, vector<128x128xf32>
    %c0_9 = arith.constant 0 : index
    %c0_10 = arith.constant 0 : index
    %5 = vector.load %arg8[%c0_9, %c0_10] : memref<128x16xf32, #tpu.memory_space<vmem>>, vector<128x16xf32>
    %c0_11 = arith.constant 0 : index
    %c0_12 = arith.constant 0 : index
    %6 = vector.load %arg9[%c0_11, %c0_12] : memref<128x16xf32, #tpu.memory_space<vmem>>, vector<128x16xf32>
    %c0_13 = arith.constant 0 : index
    %c0_14 = arith.constant 0 : index
    %7 = vector.load %arg10[%c0_13, %c0_14] : memref<128x64xf32, #tpu.memory_space<vmem>>, vector<128x64xf32>
    %c0_15 = arith.constant 0 : index
    %c0_16 = arith.constant 0 : index
    %8 = vector.load %arg11[%c0_15, %c0_16] : memref<64x128xf32, #tpu.memory_space<vmem>>, vector<64x128xf32>
    %c0_17 = arith.constant 0 : index
    %c0_18 = arith.constant 0 : index
    %9 = vector.load %arg12[%c0_17, %c0_18] : memref<64x128xf32, #tpu.memory_space<vmem>>, vector<64x128xf32>
    %c0_19 = arith.constant 0 : index
    %c0_20 = arith.constant 0 : index
    %10 = vector.load %arg13[%c0_19, %c0_20] : memref<128x128xf32, #tpu.memory_space<vmem>>, vector<128x128xf32>
    %c0_21 = arith.constant 0 : index
    %c0_22 = arith.constant 0 : index
    %11 = vector.load %arg14[%c0_21, %c0_22] : memref<128x16xf32, #tpu.memory_space<vmem>>, vector<128x16xf32>
    %c0_23 = arith.constant 0 : index
    %c0_24 = arith.constant 0 : index
    %12 = vector.load %arg15[%c0_23, %c0_24] : memref<128x16xf32, #tpu.memory_space<vmem>>, vector<128x16xf32>
    %c0_25 = arith.constant 0 : index
    %c0_26 = arith.constant 0 : index
    %13 = vector.load %arg16[%c0_25, %c0_26] : memref<128x64xf32, #tpu.memory_space<vmem>>, vector<128x64xf32>
    %c0_27 = arith.constant 0 : index
    %c0_28 = arith.constant 0 : index
    %14 = vector.load %arg17[%c0_27, %c0_28] : memref<64x32xf32, #tpu.memory_space<vmem>>, vector<64x32xf32>
    %c0_29 = arith.constant 0 : index
    %c0_30 = arith.constant 0 : index
    %15 = vector.load %arg18[%c0_29, %c0_30] : memref<64x256xf32, #tpu.memory_space<vmem>>, vector<64x256xf32>
    %c0_31 = arith.constant 0 : index
    %c0_32 = arith.constant 0 : index
    %16 = vector.load %arg1[%c0_31, %c0_32] : memref<8x32xf32, #tpu.memory_space<vmem>>, vector<8x32xf32>
    %c0_33 = arith.constant 0 : index
    %c0_34 = arith.constant 0 : index
    %17 = vector.load %arg2[%c0_33, %c0_34] : memref<8x32xf32, #tpu.memory_space<vmem>>, vector<8x32xf32>
    %cst = arith.constant dense<0.000000e+00> : vector<8x32xf32>
    %18 = tpu.matmul %16, %0, %cst {dimension_numbers = #tpu.dot_dimension_numbers<[1], [0], [0], [1], [0, 0, 1, 1], [], []>} : vector<8x32xf32>, vector<32x32xf32>, vector<8x32xf32> -> vector<8x32xf32>
    %c0_35 = arith.constant 0 : index
    %c0_36 = arith.constant 0 : index
    %19 = vector.load %arg19[%c0_35, %c0_36] : memref<24x256xf32, #tpu.memory_space<vmem>>, vector<1x32xf32>
    %20 = vector.broadcast %19 : vector<1x32xf32> to vector<8x32xf32>
    %21 = arith.addf %18, %20 : vector<8x32xf32>
    %cst_37 = arith.constant 0.000000e+00 : f32
    %22 = vector.broadcast %cst_37 : f32 to vector<8x32xf32>
    %23 = arith.maximumf %21, %22 : vector<8x32xf32>
    %c1 = arith.constant 1 : index
    %c0_38 = arith.constant 0 : index
    %24 = vector.load %arg19[%c1, %c0_38] : memref<24x256xf32, #tpu.memory_space<vmem>>, vector<1x32xf32>
    %c2 = arith.constant 2 : index
    %c0_39 = arith.constant 0 : index
    %25 = vector.load %arg19[%c2, %c0_39] : memref<24x256xf32, #tpu.memory_space<vmem>>, vector<1x32xf32>
    %cst_40 = arith.constant dense<0.000000e+00> : vector<8xf32>
    %26 = vector.multi_reduction <add>, %23, %cst_40 [1] : vector<8x32xf32> to vector<8xf32>
    %27 = vector.shape_cast %26 : vector<8xf32> to vector<8x1xf32>
    %cst_41 = arith.constant 3.200000e+01 : f32
    %28 = vector.broadcast %cst_41 : f32 to vector<8x1xf32>
    %29 = arith.divf %27, %28 : vector<8x1xf32>
    %30 = vector.broadcast %29 : vector<8x1xf32> to vector<8x32xf32>
    %31 = arith.subf %23, %30 : vector<8x32xf32>
    %32 = arith.mulf %31, %31 : vector<8x32xf32>
    %cst_42 = arith.constant dense<0.000000e+00> : vector<8xf32>
    %33 = vector.multi_reduction <add>, %32, %cst_42 [1] : vector<8x32xf32> to vector<8xf32>
    %34 = vector.shape_cast %33 : vector<8xf32> to vector<8x1xf32>
    %cst_43 = arith.constant 3.200000e+01 : f32
    %35 = vector.broadcast %cst_43 : f32 to vector<8x1xf32>
    %36 = arith.divf %34, %35 : vector<8x1xf32>
    %cst_44 = arith.constant 9.99999974E-6 : f32
    %37 = vector.broadcast %cst_44 : f32 to vector<8x1xf32>
    %38 = arith.addf %36, %37 : vector<8x1xf32>
    %39 = math.rsqrt %38 : vector<8x1xf32>
    %40 = vector.broadcast %39 : vector<8x1xf32> to vector<8x32xf32>
    %41 = arith.mulf %31, %40 : vector<8x32xf32>
    %42 = vector.broadcast %24 : vector<1x32xf32> to vector<8x32xf32>
    %43 = arith.mulf %41, %42 : vector<8x32xf32>
    %44 = vector.broadcast %25 : vector<1x32xf32> to vector<8x32xf32>
    %45 = arith.addf %43, %44 : vector<8x32xf32>
    %cst_45 = arith.constant dense<0.000000e+00> : vector<8x32xf32>
    %46 = tpu.matmul %17, %1, %cst_45 {dimension_numbers = #tpu.dot_dimension_numbers<[1], [0], [0], [1], [0, 0, 1, 1], [], []>} : vector<8x32xf32>, vector<32x32xf32>, vector<8x32xf32> -> vector<8x32xf32>
    %c3 = arith.constant 3 : index
    %c0_46 = arith.constant 0 : index
    %47 = vector.load %arg19[%c3, %c0_46] : memref<24x256xf32, #tpu.memory_space<vmem>>, vector<1x32xf32>
    %48 = vector.broadcast %47 : vector<1x32xf32> to vector<8x32xf32>
    %49 = arith.addf %46, %48 : vector<8x32xf32>
    %cst_47 = arith.constant 0.000000e+00 : f32
    %50 = vector.broadcast %cst_47 : f32 to vector<8x32xf32>
    %51 = arith.maximumf %49, %50 : vector<8x32xf32>
    %c4 = arith.constant 4 : index
    %c0_48 = arith.constant 0 : index
    %52 = vector.load %arg19[%c4, %c0_48] : memref<24x256xf32, #tpu.memory_space<vmem>>, vector<1x32xf32>
    %c5 = arith.constant 5 : index
    %c0_49 = arith.constant 0 : index
    %53 = vector.load %arg19[%c5, %c0_49] : memref<24x256xf32, #tpu.memory_space<vmem>>, vector<1x32xf32>
    %cst_50 = arith.constant dense<0.000000e+00> : vector<8xf32>
    %54 = vector.multi_reduction <add>, %51, %cst_50 [1] : vector<8x32xf32> to vector<8xf32>
    %55 = vector.shape_cast %54 : vector<8xf32> to vector<8x1xf32>
    %cst_51 = arith.constant 3.200000e+01 : f32
    %56 = vector.broadcast %cst_51 : f32 to vector<8x1xf32>
    %57 = arith.divf %55, %56 : vector<8x1xf32>
    %58 = vector.broadcast %57 : vector<8x1xf32> to vector<8x32xf32>
    %59 = arith.subf %51, %58 : vector<8x32xf32>
    %60 = arith.mulf %59, %59 : vector<8x32xf32>
    %cst_52 = arith.constant dense<0.000000e+00> : vector<8xf32>
    %61 = vector.multi_reduction <add>, %60, %cst_52 [1] : vector<8x32xf32> to vector<8xf32>
    %62 = vector.shape_cast %61 : vector<8xf32> to vector<8x1xf32>
    %cst_53 = arith.constant 3.200000e+01 : f32
    %63 = vector.broadcast %cst_53 : f32 to vector<8x1xf32>
    %64 = arith.divf %62, %63 : vector<8x1xf32>
    %cst_54 = arith.constant 9.99999974E-6 : f32
    %65 = vector.broadcast %cst_54 : f32 to vector<8x1xf32>
    %66 = arith.addf %64, %65 : vector<8x1xf32>
    %67 = math.rsqrt %66 : vector<8x1xf32>
    %68 = vector.broadcast %67 : vector<8x1xf32> to vector<8x32xf32>
    %69 = arith.mulf %59, %68 : vector<8x32xf32>
    %70 = vector.broadcast %52 : vector<1x32xf32> to vector<8x32xf32>
    %71 = arith.mulf %69, %70 : vector<8x32xf32>
    %72 = vector.broadcast %53 : vector<1x32xf32> to vector<8x32xf32>
    %73 = arith.addf %71, %72 : vector<8x32xf32>
    %74 = tpu.concatenate %45, %73 in 1 : vector<8x32xf32>, vector<8x32xf32> -> vector<8x64xf32>
    %c6 = arith.constant 6 : index
    %c0_55 = arith.constant 0 : index
    %75 = vector.load %arg19[%c6, %c0_55] : memref<24x256xf32, #tpu.memory_space<vmem>>, vector<1x128xf32>
    %c7 = arith.constant 7 : index
    %c0_56 = arith.constant 0 : index
    %76 = vector.load %arg19[%c7, %c0_56] : memref<24x256xf32, #tpu.memory_space<vmem>>, vector<1x128xf32>
    %c8 = arith.constant 8 : index
    %c0_57 = arith.constant 0 : index
    %77 = vector.load %arg19[%c8, %c0_57] : memref<24x256xf32, #tpu.memory_space<vmem>>, vector<1x128xf32>
    %c9 = arith.constant 9 : index
    %c0_58 = arith.constant 0 : index
    %78 = vector.load %arg19[%c9, %c0_58] : memref<24x256xf32, #tpu.memory_space<vmem>>, vector<1x128xf32>
    %c10 = arith.constant 10 : index
    %c0_59 = arith.constant 0 : index
    %79 = vector.load %arg19[%c10, %c0_59] : memref<24x256xf32, #tpu.memory_space<vmem>>, vector<1x64xf32>
    %c11 = arith.constant 11 : index
    %c0_60 = arith.constant 0 : index
    %80 = vector.load %arg19[%c11, %c0_60] : memref<24x256xf32, #tpu.memory_space<vmem>>, vector<1x64xf32>
    %cst_61 = arith.constant dense<0.000000e+00> : vector<8x128xf32>
    %81 = tpu.matmul %74, %2, %cst_61 {dimension_numbers = #tpu.dot_dimension_numbers<[1], [0], [0], [1], [0, 0, 1, 1], [], []>} : vector<8x64xf32>, vector<64x128xf32>, vector<8x128xf32> -> vector<8x128xf32>
    %cst_62 = arith.constant dense<0.000000e+00> : vector<8x128xf32>
    %82 = tpu.matmul %74, %3, %cst_62 {dimension_numbers = #tpu.dot_dimension_numbers<[1], [0], [0], [1], [0, 0, 1, 1], [], []>} : vector<8x64xf32>, vector<64x128xf32>, vector<8x128xf32> -> vector<8x128xf32>
    %83 = vector.broadcast %75 : vector<1x128xf32> to vector<8x128xf32>
    %84 = arith.mulf %81, %83 : vector<8x128xf32>
    %85 = vector.broadcast %76 : vector<1x128xf32> to vector<8x128xf32>
    %86 = arith.addf %84, %85 : vector<8x128xf32>
    %87 = arith.negf %86 : vector<8x128xf32>
    %88 = math.exp %87 : vector<8x128xf32>
    %cst_63 = arith.constant 1.000000e+00 : f32
    %89 = vector.broadcast %cst_63 : f32 to vector<8x128xf32>
    %90 = arith.addf %89, %88 : vector<8x128xf32>
    %91 = arith.divf %89, %90 : vector<8x128xf32>
    %92 = arith.mulf %86, %91 : vector<8x128xf32>
    %cst_64 = arith.constant dense<0.000000e+00> : vector<8x128xf32>
    %93 = tpu.matmul %92, %4, %cst_64 {dimension_numbers = #tpu.dot_dimension_numbers<[1], [0], [0], [1], [0, 0, 1, 1], [], []>} : vector<8x128xf32>, vector<128x128xf32>, vector<8x128xf32> -> vector<8x128xf32>
    %94 = vector.broadcast %77 : vector<1x128xf32> to vector<8x128xf32>
    %95 = arith.addf %93, %94 : vector<8x128xf32>
    %cst_65 = arith.constant 0.000000e+00 : f32
    %96 = vector.broadcast %cst_65 : f32 to vector<8x128xf32>
    %97 = arith.maximumf %95, %96 : vector<8x128xf32>
    %98 = vector.broadcast %cst_65 : f32 to vector<8x128xf32>
    %99 = arith.subf %95, %98 : vector<8x128xf32>
    %100 = arith.cmpf one, %99, %99 : vector<8x128xf32>
    %101 = vector.broadcast %cst_65 : f32 to vector<8x128xf32>
    %102 = arith.addf %95, %101 : vector<8x128xf32>
    %103 = math.absf %99 : vector<8x128xf32>
    %cst_66 = arith.constant 0.000000e+00 : f32
    %104 = vector.broadcast %cst_66 : f32 to vector<8x128xf32>
    %105 = arith.subf %104, %103 : vector<8x128xf32>
    %106 = math.exp %105 : vector<8x128xf32>
    %107 = math.log1p %106 : vector<8x128xf32>
    %108 = arith.addf %97, %107 : vector<8x128xf32>
    %109 = arith.select %100, %102, %108 : vector<8x128xi1>, vector<8x128xf32>
    %cst_67 = arith.constant dense<0.000000e+00> : vector<8x16xf32>
    %110 = tpu.matmul %92, %5, %cst_67 {dimension_numbers = #tpu.dot_dimension_numbers<[1], [0], [0], [1], [0, 0, 1, 1], [], []>} : vector<8x128xf32>, vector<128x16xf32>, vector<8x16xf32> -> vector<8x16xf32>
    %cst_68 = arith.constant dense<0.000000e+00> : vector<8x16xf32>
    %111 = tpu.matmul %92, %6, %cst_68 {dimension_numbers = #tpu.dot_dimension_numbers<[1], [0], [0], [1], [0, 0, 1, 1], [], []>} : vector<8x128xf32>, vector<128x16xf32>, vector<8x16xf32> -> vector<8x16xf32>
    %112 = arith.mulf %110, %111 : vector<8x16xf32>
    %cst_69 = arith.constant dense<0.000000e+00> : vector<8xf32>
    %113 = vector.multi_reduction <add>, %112, %cst_69 [1] : vector<8x16xf32> to vector<8xf32>
    %114 = vector.shape_cast %113 : vector<8xf32> to vector<8x1xf32>
    %115 = vector.broadcast %114 : vector<8x1xf32> to vector<8x128xf32>
    %116 = arith.mulf %109, %115 : vector<8x128xf32>
    %117 = vector.broadcast %78 : vector<1x128xf32> to vector<8x128xf32>
    %118 = arith.addf %116, %117 : vector<8x128xf32>
    %119 = arith.mulf %118, %92 : vector<8x128xf32>
    %120 = arith.negf %82 : vector<8x128xf32>
    %121 = math.exp %120 : vector<8x128xf32>
    %cst_70 = arith.constant 1.000000e+00 : f32
    %122 = vector.broadcast %cst_70 : f32 to vector<8x128xf32>
    %123 = arith.addf %122, %121 : vector<8x128xf32>
    %124 = arith.divf %122, %123 : vector<8x128xf32>
    %125 = arith.mulf %82, %124 : vector<8x128xf32>
    %126 = arith.mulf %119, %125 : vector<8x128xf32>
    %cst_71 = arith.constant dense<0.000000e+00> : vector<8x64xf32>
    %127 = tpu.matmul %126, %7, %cst_71 {dimension_numbers = #tpu.dot_dimension_numbers<[1], [0], [0], [1], [0, 0, 1, 1], [], []>} : vector<8x128xf32>, vector<128x64xf32>, vector<8x64xf32> -> vector<8x64xf32>
    %128 = arith.addf %127, %74 : vector<8x64xf32>
    %cst_72 = arith.constant dense<0.000000e+00> : vector<8xf32>
    %129 = vector.multi_reduction <add>, %128, %cst_72 [1] : vector<8x64xf32> to vector<8xf32>
    %130 = vector.shape_cast %129 : vector<8xf32> to vector<8x1xf32>
    %cst_73 = arith.constant 6.400000e+01 : f32
    %131 = vector.broadcast %cst_73 : f32 to vector<8x1xf32>
    %132 = arith.divf %130, %131 : vector<8x1xf32>
    %133 = vector.broadcast %132 : vector<8x1xf32> to vector<8x64xf32>
    %134 = arith.subf %128, %133 : vector<8x64xf32>
    %135 = arith.mulf %134, %134 : vector<8x64xf32>
    %cst_74 = arith.constant dense<0.000000e+00> : vector<8xf32>
    %136 = vector.multi_reduction <add>, %135, %cst_74 [1] : vector<8x64xf32> to vector<8xf32>
    %137 = vector.shape_cast %136 : vector<8xf32> to vector<8x1xf32>
    %cst_75 = arith.constant 6.400000e+01 : f32
    %138 = vector.broadcast %cst_75 : f32 to vector<8x1xf32>
    %139 = arith.divf %137, %138 : vector<8x1xf32>
    %cst_76 = arith.constant 9.99999974E-6 : f32
    %140 = vector.broadcast %cst_76 : f32 to vector<8x1xf32>
    %141 = arith.addf %139, %140 : vector<8x1xf32>
    %142 = math.rsqrt %141 : vector<8x1xf32>
    %143 = vector.broadcast %142 : vector<8x1xf32> to vector<8x64xf32>
    %144 = arith.mulf %134, %143 : vector<8x64xf32>
    %145 = vector.broadcast %79 : vector<1x64xf32> to vector<8x64xf32>
    %146 = arith.mulf %144, %145 : vector<8x64xf32>
    %147 = vector.broadcast %80 : vector<1x64xf32> to vector<8x64xf32>
    %148 = arith.addf %146, %147 : vector<8x64xf32>
    %c12 = arith.constant 12 : index
    %c0_77 = arith.constant 0 : index
    %149 = vector.load %arg19[%c12, %c0_77] : memref<24x256xf32, #tpu.memory_space<vmem>>, vector<1x128xf32>
    %c13 = arith.constant 13 : index
    %c0_78 = arith.constant 0 : index
    %150 = vector.load %arg19[%c13, %c0_78] : memref<24x256xf32, #tpu.memory_space<vmem>>, vector<1x128xf32>
    %c14 = arith.constant 14 : index
    %c0_79 = arith.constant 0 : index
    %151 = vector.load %arg19[%c14, %c0_79] : memref<24x256xf32, #tpu.memory_space<vmem>>, vector<1x128xf32>
    %c15 = arith.constant 15 : index
    %c0_80 = arith.constant 0 : index
    %152 = vector.load %arg19[%c15, %c0_80] : memref<24x256xf32, #tpu.memory_space<vmem>>, vector<1x128xf32>
    %c16 = arith.constant 16 : index
    %c0_81 = arith.constant 0 : index
    %153 = vector.load %arg19[%c16, %c0_81] : memref<24x256xf32, #tpu.memory_space<vmem>>, vector<1x64xf32>
    %c17 = arith.constant 17 : index
    %c0_82 = arith.constant 0 : index
    %154 = vector.load %arg19[%c17, %c0_82] : memref<24x256xf32, #tpu.memory_space<vmem>>, vector<1x64xf32>
    %cst_83 = arith.constant dense<0.000000e+00> : vector<8x128xf32>
    %155 = tpu.matmul %148, %8, %cst_83 {dimension_numbers = #tpu.dot_dimension_numbers<[1], [0], [0], [1], [0, 0, 1, 1], [], []>} : vector<8x64xf32>, vector<64x128xf32>, vector<8x128xf32> -> vector<8x128xf32>
    %cst_84 = arith.constant dense<0.000000e+00> : vector<8x128xf32>
    %156 = tpu.matmul %148, %9, %cst_84 {dimension_numbers = #tpu.dot_dimension_numbers<[1], [0], [0], [1], [0, 0, 1, 1], [], []>} : vector<8x64xf32>, vector<64x128xf32>, vector<8x128xf32> -> vector<8x128xf32>
    %157 = vector.broadcast %149 : vector<1x128xf32> to vector<8x128xf32>
    %158 = arith.mulf %155, %157 : vector<8x128xf32>
    %159 = vector.broadcast %150 : vector<1x128xf32> to vector<8x128xf32>
    %160 = arith.addf %158, %159 : vector<8x128xf32>
    %161 = arith.negf %160 : vector<8x128xf32>
    %162 = math.exp %161 : vector<8x128xf32>
    %cst_85 = arith.constant 1.000000e+00 : f32
    %163 = vector.broadcast %cst_85 : f32 to vector<8x128xf32>
    %164 = arith.addf %163, %162 : vector<8x128xf32>
    %165 = arith.divf %163, %164 : vector<8x128xf32>
    %166 = arith.mulf %160, %165 : vector<8x128xf32>
    %cst_86 = arith.constant dense<0.000000e+00> : vector<8x128xf32>
    %167 = tpu.matmul %166, %10, %cst_86 {dimension_numbers = #tpu.dot_dimension_numbers<[1], [0], [0], [1], [0, 0, 1, 1], [], []>} : vector<8x128xf32>, vector<128x128xf32>, vector<8x128xf32> -> vector<8x128xf32>
    %168 = vector.broadcast %151 : vector<1x128xf32> to vector<8x128xf32>
    %169 = arith.addf %167, %168 : vector<8x128xf32>
    %cst_87 = arith.constant 0.000000e+00 : f32
    %170 = vector.broadcast %cst_87 : f32 to vector<8x128xf32>
    %171 = arith.maximumf %169, %170 : vector<8x128xf32>
    %172 = vector.broadcast %cst_87 : f32 to vector<8x128xf32>
    %173 = arith.subf %169, %172 : vector<8x128xf32>
    %174 = arith.cmpf one, %173, %173 : vector<8x128xf32>
    %175 = vector.broadcast %cst_87 : f32 to vector<8x128xf32>
    %176 = arith.addf %169, %175 : vector<8x128xf32>
    %177 = math.absf %173 : vector<8x128xf32>
    %cst_88 = arith.constant 0.000000e+00 : f32
    %178 = vector.broadcast %cst_88 : f32 to vector<8x128xf32>
    %179 = arith.subf %178, %177 : vector<8x128xf32>
    %180 = math.exp %179 : vector<8x128xf32>
    %181 = math.log1p %180 : vector<8x128xf32>
    %182 = arith.addf %171, %181 : vector<8x128xf32>
    %183 = arith.select %174, %176, %182 : vector<8x128xi1>, vector<8x128xf32>
    %cst_89 = arith.constant dense<0.000000e+00> : vector<8x16xf32>
    %184 = tpu.matmul %166, %11, %cst_89 {dimension_numbers = #tpu.dot_dimension_numbers<[1], [0], [0], [1], [0, 0, 1, 1], [], []>} : vector<8x128xf32>, vector<128x16xf32>, vector<8x16xf32> -> vector<8x16xf32>
    %cst_90 = arith.constant dense<0.000000e+00> : vector<8x16xf32>
    %185 = tpu.matmul %166, %12, %cst_90 {dimension_numbers = #tpu.dot_dimension_numbers<[1], [0], [0], [1], [0, 0, 1, 1], [], []>} : vector<8x128xf32>, vector<128x16xf32>, vector<8x16xf32> -> vector<8x16xf32>
    %186 = arith.mulf %184, %185 : vector<8x16xf32>
    %cst_91 = arith.constant dense<0.000000e+00> : vector<8xf32>
    %187 = vector.multi_reduction <add>, %186, %cst_91 [1] : vector<8x16xf32> to vector<8xf32>
    %188 = vector.shape_cast %187 : vector<8xf32> to vector<8x1xf32>
    %189 = vector.broadcast %188 : vector<8x1xf32> to vector<8x128xf32>
    %190 = arith.mulf %183, %189 : vector<8x128xf32>
    %191 = vector.broadcast %152 : vector<1x128xf32> to vector<8x128xf32>
    %192 = arith.addf %190, %191 : vector<8x128xf32>
    %193 = arith.mulf %192, %166 : vector<8x128xf32>
    %194 = arith.negf %156 : vector<8x128xf32>
    %195 = math.exp %194 : vector<8x128xf32>
    %cst_92 = arith.constant 1.000000e+00 : f32
    %196 = vector.broadcast %cst_92 : f32 to vector<8x128xf32>
    %197 = arith.addf %196, %195 : vector<8x128xf32>
    %198 = arith.divf %196, %197 : vector<8x128xf32>
    %199 = arith.mulf %156, %198 : vector<8x128xf32>
    %200 = arith.mulf %193, %199 : vector<8x128xf32>
    %cst_93 = arith.constant dense<0.000000e+00> : vector<8x64xf32>
    %201 = tpu.matmul %200, %13, %cst_93 {dimension_numbers = #tpu.dot_dimension_numbers<[1], [0], [0], [1], [0, 0, 1, 1], [], []>} : vector<8x128xf32>, vector<128x64xf32>, vector<8x64xf32> -> vector<8x64xf32>
    %202 = arith.addf %201, %148 : vector<8x64xf32>
    %cst_94 = arith.constant dense<0.000000e+00> : vector<8xf32>
    %203 = vector.multi_reduction <add>, %202, %cst_94 [1] : vector<8x64xf32> to vector<8xf32>
    %204 = vector.shape_cast %203 : vector<8xf32> to vector<8x1xf32>
    %cst_95 = arith.constant 6.400000e+01 : f32
    %205 = vector.broadcast %cst_95 : f32 to vector<8x1xf32>
    %206 = arith.divf %204, %205 : vector<8x1xf32>
    %207 = vector.broadcast %206 : vector<8x1xf32> to vector<8x64xf32>
    %208 = arith.subf %202, %207 : vector<8x64xf32>
    %209 = arith.mulf %208, %208 : vector<8x64xf32>
    %cst_96 = arith.constant dense<0.000000e+00> : vector<8xf32>
    %210 = vector.multi_reduction <add>, %209, %cst_96 [1] : vector<8x64xf32> to vector<8xf32>
    %211 = vector.shape_cast %210 : vector<8xf32> to vector<8x1xf32>
    %cst_97 = arith.constant 6.400000e+01 : f32
    %212 = vector.broadcast %cst_97 : f32 to vector<8x1xf32>
    %213 = arith.divf %211, %212 : vector<8x1xf32>
    %cst_98 = arith.constant 9.99999974E-6 : f32
    %214 = vector.broadcast %cst_98 : f32 to vector<8x1xf32>
    %215 = arith.addf %213, %214 : vector<8x1xf32>
    %216 = math.rsqrt %215 : vector<8x1xf32>
    %217 = vector.broadcast %216 : vector<8x1xf32> to vector<8x64xf32>
    %218 = arith.mulf %208, %217 : vector<8x64xf32>
    %219 = vector.broadcast %153 : vector<1x64xf32> to vector<8x64xf32>
    %220 = arith.mulf %218, %219 : vector<8x64xf32>
    %221 = vector.broadcast %154 : vector<1x64xf32> to vector<8x64xf32>
    %222 = arith.addf %220, %221 : vector<8x64xf32>
    %cst_99 = arith.constant dense<0.000000e+00> : vector<8x32xf32>
    %223 = tpu.matmul %222, %14, %cst_99 {dimension_numbers = #tpu.dot_dimension_numbers<[1], [0], [0], [1], [0, 0, 1, 1], [], []>} : vector<8x64xf32>, vector<64x32xf32>, vector<8x32xf32> -> vector<8x32xf32>
    %c18 = arith.constant 18 : index
    %c0_100 = arith.constant 0 : index
    %224 = vector.load %arg19[%c18, %c0_100] : memref<24x256xf32, #tpu.memory_space<vmem>>, vector<1x32xf32>
    %225 = vector.broadcast %224 : vector<1x32xf32> to vector<8x32xf32>
    %226 = arith.addf %223, %225 : vector<8x32xf32>
    %cst_101 = arith.constant 0.000000e+00 : f32
    %227 = vector.broadcast %cst_101 : f32 to vector<8x32xf32>
    %228 = arith.maximumf %226, %227 : vector<8x32xf32>
    %c19 = arith.constant 19 : index
    %c0_102 = arith.constant 0 : index
    %229 = vector.load %arg19[%c19, %c0_102] : memref<24x256xf32, #tpu.memory_space<vmem>>, vector<1x32xf32>
    %230 = vector.broadcast %229 : vector<1x32xf32> to vector<8x32xf32>
    %231 = arith.mulf %228, %230 : vector<8x32xf32>
    %cst_103 = arith.constant dense<0.000000e+00> : vector<8xf32>
    %232 = vector.multi_reduction <add>, %231, %cst_103 [1] : vector<8x32xf32> to vector<8xf32>
    %233 = vector.shape_cast %232 : vector<8xf32> to vector<8x1xf32>
    %c20 = arith.constant 20 : index
    %c0_104 = arith.constant 0 : index
    %234 = vector.load %arg19[%c20, %c0_104] : memref<24x256xf32, #tpu.memory_space<vmem>>, vector<1x1xf32>
    %235 = vector.broadcast %234 : vector<1x1xf32> to vector<8x1xf32>
    %236 = arith.addf %233, %235 : vector<8x1xf32>
    %237 = arith.negf %236 : vector<8x1xf32>
    %238 = math.exp %237 : vector<8x1xf32>
    %cst_105 = arith.constant 1.000000e+00 : f32
    %239 = vector.broadcast %cst_105 : f32 to vector<8x1xf32>
    %240 = arith.addf %239, %238 : vector<8x1xf32>
    %241 = arith.divf %239, %240 : vector<8x1xf32>
    %242 = tpu.iota {dimensions = array<i32: 1>} : vector<8x128xi32>
    %c0_i32 = arith.constant 0 : i32
    %243 = vector.broadcast %c0_i32 : i32 to vector<8x128xi32>
    %244 = arith.cmpi eq, %242, %243 : vector<8x128xi32>
    %c1_i32 = arith.constant 1 : i32
    %245 = vector.broadcast %c1_i32 : i32 to vector<8x128xi32>
    %246 = arith.cmpi eq, %242, %245 : vector<8x128xi32>
    %cst_106 = arith.constant 1.000000e+00 : f32
    %247 = vector.broadcast %cst_106 : f32 to vector<8x1xf32>
    %248 = arith.subf %247, %241 : vector<8x1xf32>
    %cst_107 = arith.constant 0.000000e+00 : f32
    %249 = vector.shape_cast %248 : vector<8x1xf32> to vector<8x1xf32>
    %250 = vector.broadcast %249 : vector<8x1xf32> to vector<8x128xf32>
    %251 = vector.broadcast %cst_107 : f32 to vector<8x128xf32>
    %252 = arith.select %246, %250, %251 : vector<8x128xi1>, vector<8x128xf32>
    %253 = vector.shape_cast %241 : vector<8x1xf32> to vector<8x1xf32>
    %254 = vector.broadcast %253 : vector<8x1xf32> to vector<8x128xf32>
    %255 = arith.select %244, %254, %252 : vector<8x128xi1>, vector<8x128xf32>
    %c0_108 = arith.constant 0 : index
    %c0_109 = arith.constant 0 : index
    %256 = vector.load %arg21[%c0_108, %c0_109] : memref<8x128xf32, #tpu.memory_space<vmem>>, vector<8x128xf32>
    tpu.vector_store %arg21[%c0_108, %c0_109], %255 {strides = array<i32>} : memref<8x128xf32, #tpu.memory_space<vmem>>, vector<8x128xf32>,
    %cst_110 = arith.constant dense<0.000000e+00> : vector<8x256xf32>
    %257 = tpu.matmul %222, %15, %cst_110 {dimension_numbers = #tpu.dot_dimension_numbers<[1], [0], [0], [1], [0, 0, 1, 1], [], []>} : vector<8x64xf32>, vector<64x256xf32>, vector<8x256xf32> -> vector<8x256xf32>
    %c21 = arith.constant 21 : index
    %c0_111 = arith.constant 0 : index
    %258 = vector.load %arg19[%c21, %c0_111] : memref<24x256xf32, #tpu.memory_space<vmem>>, vector<1x256xf32>
    %259 = vector.broadcast %258 : vector<1x256xf32> to vector<8x256xf32>
    %260 = arith.addf %257, %259 : vector<8x256xf32>
    %c22 = arith.constant 22 : index
    %c0_112 = arith.constant 0 : index
    %261 = vector.load %arg19[%c22, %c0_112] : memref<24x256xf32, #tpu.memory_space<vmem>>, vector<1x256xf32>
    %c23 = arith.constant 23 : index
    %c0_113 = arith.constant 0 : index
    %262 = vector.load %arg19[%c23, %c0_113] : memref<24x256xf32, #tpu.memory_space<vmem>>, vector<1x256xf32>
    %cst_114 = arith.constant dense<0.000000e+00> : vector<8xf32>
    %263 = vector.multi_reduction <add>, %260, %cst_114 [1] : vector<8x256xf32> to vector<8xf32>
    %264 = vector.shape_cast %263 : vector<8xf32> to vector<8x1xf32>
    %cst_115 = arith.constant 2.560000e+02 : f32
    %265 = vector.broadcast %cst_115 : f32 to vector<8x1xf32>
    %266 = arith.divf %264, %265 : vector<8x1xf32>
    %267 = vector.broadcast %266 : vector<8x1xf32> to vector<8x256xf32>
    %268 = arith.subf %260, %267 : vector<8x256xf32>
    %269 = arith.mulf %268, %268 : vector<8x256xf32>
    %cst_116 = arith.constant dense<0.000000e+00> : vector<8xf32>
    %270 = vector.multi_reduction <add>, %269, %cst_116 [1] : vector<8x256xf32> to vector<8xf32>
    %271 = vector.shape_cast %270 : vector<8xf32> to vector<8x1xf32>
    %cst_117 = arith.constant 2.560000e+02 : f32
    %272 = vector.broadcast %cst_117 : f32 to vector<8x1xf32>
    %273 = arith.divf %271, %272 : vector<8x1xf32>
    %cst_118 = arith.constant 9.99999974E-6 : f32
    %274 = vector.broadcast %cst_118 : f32 to vector<8x1xf32>
    %275 = arith.addf %273, %274 : vector<8x1xf32>
    %276 = math.rsqrt %275 : vector<8x1xf32>
    %277 = vector.broadcast %276 : vector<8x1xf32> to vector<8x256xf32>
    %278 = arith.mulf %268, %277 : vector<8x256xf32>
    %279 = vector.broadcast %261 : vector<1x256xf32> to vector<8x256xf32>
    %280 = arith.mulf %278, %279 : vector<8x256xf32>
    %281 = vector.broadcast %262 : vector<1x256xf32> to vector<8x256xf32>
    %282 = arith.addf %280, %281 : vector<8x256xf32>
    %c0_119 = arith.constant 0 : index
    %c0_120 = arith.constant 0 : index
    %283 = vector.load %arg20[%c0_119, %c0_120] : memref<8x256xf32, #tpu.memory_space<vmem>>, vector<8x256xf32>
    tpu.vector_store %arg20[%c0_119, %c0_120], %282 {strides = array<i32>} : memref<8x256xf32, #tpu.memory_space<vmem>>, vector<8x256xf32>,
    return
  }
  func.func @transform_0(%arg0: i32) -> (i32, i32) {
    %c0_i32 = arith.constant 0 : i32
    %c0_i32_0 = arith.constant 0 : i32
    return %arg0, %c0_i32 : i32, i32
  }
  func.func @transform_1(%arg0: i32) -> (i32, i32) {
    %c0_i32 = arith.constant 0 : i32
    %c0_i32_0 = arith.constant 0 : i32
    return %arg0, %c0_i32 : i32, i32
  }
  func.func @transform_2(%arg0: i32) -> (i32, i32) {
    %c0_i32 = arith.constant 0 : i32
    %c0_i32_0 = arith.constant 0 : i32
    %c0_i32_1 = arith.constant 0 : i32
    return %c0_i32, %c0_i32_0 : i32, i32
  }
  func.func @transform_3(%arg0: i32) -> (i32, i32) {
    %c0_i32 = arith.constant 0 : i32
    %c0_i32_0 = arith.constant 0 : i32
    %c0_i32_1 = arith.constant 0 : i32
    return %c0_i32, %c0_i32_0 : i32, i32
  }
  func.func @transform_4(%arg0: i32) -> (i32, i32) {
    %c0_i32 = arith.constant 0 : i32
    %c0_i32_0 = arith.constant 0 : i32
    %c0_i32_1 = arith.constant 0 : i32
    return %c0_i32, %c0_i32_0 : i32, i32
  }
  func.func @transform_5(%arg0: i32) -> (i32, i32) {
    %c0_i32 = arith.constant 0 : i32
    %c0_i32_0 = arith.constant 0 : i32
    %c0_i32_1 = arith.constant 0 : i32
    return %c0_i32, %c0_i32_0 : i32, i32
  }
  func.func @transform_6(%arg0: i32) -> (i32, i32) {
    %c0_i32 = arith.constant 0 : i32
    %c0_i32_0 = arith.constant 0 : i32
    %c0_i32_1 = arith.constant 0 : i32
    return %c0_i32, %c0_i32_0 : i32, i32
  }
  func.func @transform_7(%arg0: i32) -> (i32, i32) {
    %c0_i32 = arith.constant 0 : i32
    %c0_i32_0 = arith.constant 0 : i32
    %c0_i32_1 = arith.constant 0 : i32
    return %c0_i32, %c0_i32_0 : i32, i32
  }
  func.func @transform_8(%arg0: i32) -> (i32, i32) {
    %c0_i32 = arith.constant 0 : i32
    %c0_i32_0 = arith.constant 0 : i32
    %c0_i32_1 = arith.constant 0 : i32
    return %c0_i32, %c0_i32_0 : i32, i32
  }
  func.func @transform_9(%arg0: i32) -> (i32, i32) {
    %c0_i32 = arith.constant 0 : i32
    %c0_i32_0 = arith.constant 0 : i32
    %c0_i32_1 = arith.constant 0 : i32
    return %c0_i32, %c0_i32_0 : i32, i32
  }
  func.func @transform_10(%arg0: i32) -> (i32, i32) {
    %c0_i32 = arith.constant 0 : i32
    %c0_i32_0 = arith.constant 0 : i32
    %c0_i32_1 = arith.constant 0 : i32
    return %c0_i32, %c0_i32_0 : i32, i32
  }
  func.func @transform_11(%arg0: i32) -> (i32, i32) {
    %c0_i32 = arith.constant 0 : i32
    %c0_i32_0 = arith.constant 0 : i32
    %c0_i32_1 = arith.constant 0 : i32
    return %c0_i32, %c0_i32_0 : i32, i32
  }
  func.func @transform_12(%arg0: i32) -> (i32, i32) {
    %c0_i32 = arith.constant 0 : i32
    %c0_i32_0 = arith.constant 0 : i32
    %c0_i32_1 = arith.constant 0 : i32
    return %c0_i32, %c0_i32_0 : i32, i32
  }
  func.func @transform_13(%arg0: i32) -> (i32, i32) {
    %c0_i32 = arith.constant 0 : i32
    %c0_i32_0 = arith.constant 0 : i32
    %c0_i32_1 = arith.constant 0 : i32
    return %c0_i32, %c0_i32_0 : i32, i32
  }
  func.func @transform_14(%arg0: i32) -> (i32, i32) {
    %c0_i32 = arith.constant 0 : i32
    %c0_i32_0 = arith.constant 0 : i32
    %c0_i32_1 = arith.constant 0 : i32
    return %c0_i32, %c0_i32_0 : i32, i32
  }
  func.func @transform_15(%arg0: i32) -> (i32, i32) {
    %c0_i32 = arith.constant 0 : i32
    %c0_i32_0 = arith.constant 0 : i32
    %c0_i32_1 = arith.constant 0 : i32
    return %c0_i32, %c0_i32_0 : i32, i32
  }
  func.func @transform_16(%arg0: i32) -> (i32, i32) {
    %c0_i32 = arith.constant 0 : i32
    %c0_i32_0 = arith.constant 0 : i32
    %c0_i32_1 = arith.constant 0 : i32
    return %c0_i32, %c0_i32_0 : i32, i32
  }
  func.func @transform_17(%arg0: i32) -> (i32, i32) {
    %c0_i32 = arith.constant 0 : i32
    %c0_i32_0 = arith.constant 0 : i32
    %c0_i32_1 = arith.constant 0 : i32
    return %c0_i32, %c0_i32_0 : i32, i32
  }
  func.func @transform_18(%arg0: i32) -> (i32, i32) {
    %c0_i32 = arith.constant 0 : i32
    %c0_i32_0 = arith.constant 0 : i32
    %c0_i32_1 = arith.constant 0 : i32
    return %c0_i32, %c0_i32_0 : i32, i32
  }
  func.func @transform_19(%arg0: i32) -> (i32, i32) {
    %c0_i32 = arith.constant 0 : i32
    %c0_i32_0 = arith.constant 0 : i32
    return %arg0, %c0_i32 : i32, i32
  }
  func.func @transform_20(%arg0: i32) -> (i32, i32) {
    %c0_i32 = arith.constant 0 : i32
    %c0_i32_0 = arith.constant 0 : i32
    return %arg0, %c0_i32 : i32, i32
  }
}

</mosaic_0001>

<llo_original>
// kernel: tpu_custom_call.1
$region0: #{tpu_custom_call.1}
  #allocation0 [shape = 'u32[]', space=smem, size = 0x4, offset = 0x4, fixed_abs, tag = 'smem constant byte address 0x4 - core index']
  #allocation1 [shape = 'u32[144,128]{1,0:T(1,128)}', space=vmem, size = 0x12000, scoped, tag = 'internal scratch']
  %s0 = inlined_call_operand.vmem [shape: f32[8,32], index: 0, kind: input, shape index: {}]
  %s1 = inlined_call_operand.vmem [shape: f32[8,32], index: 1, kind: input, shape index: {}]
  %s2 = inlined_call_operand.vmem [shape: f32[32,32], index: 2, kind: input, shape index: {}]
  %s3 = inlined_call_operand.vmem [shape: f32[32,32], index: 3, kind: input, shape index: {}]
  %s4 = inlined_call_operand.vmem [shape: f32[64,128], index: 4, kind: input, shape index: {}]
  %s5 = inlined_call_operand.vmem [shape: f32[64,128], index: 5, kind: input, shape index: {}]
  %s6 = inlined_call_operand.vmem [shape: f32[128,128], index: 6, kind: input, shape index: {}]
  %s7 = inlined_call_operand.vmem [shape: f32[128,16], index: 7, kind: input, shape index: {}]
  %s8 = inlined_call_operand.vmem [shape: f32[128,16], index: 8, kind: input, shape index: {}]
  %s9 = inlined_call_operand.vmem [shape: f32[128,64], index: 9, kind: input, shape index: {}]
  %s10 = inlined_call_operand.vmem [shape: f32[64,128], index: 10, kind: input, shape index: {}]
  %s11 = inlined_call_operand.vmem [shape: f32[64,128], index: 11, kind: input, shape index: {}]
  %s12 = inlined_call_operand.vmem [shape: f32[128,128], index: 12, kind: input, shape index: {}]
  %s13 = inlined_call_operand.vmem [shape: f32[128,16], index: 13, kind: input, shape index: {}]
  %s14 = inlined_call_operand.vmem [shape: f32[128,16], index: 14, kind: input, shape index: {}]
  %s15 = inlined_call_operand.vmem [shape: f32[128,64], index: 15, kind: input, shape index: {}]
  %s16 = inlined_call_operand.vmem [shape: f32[64,32], index: 16, kind: input, shape index: {}]
  %s17 = inlined_call_operand.vmem [shape: f32[64,256], index: 17, kind: input, shape index: {}]
  %s18 = inlined_call_operand.vmem [shape: f32[24,256], index: 18, kind: input, shape index: {}]
  %s19 = inlined_call_operand.hbm [shape: f32[8,256], index: 19, kind: output, shape index: {0}]
  %s20 = inlined_call_operand.hbm [shape: f32[8,128], index: 20, kind: output, shape index: {1}]
  %21 = xla_tuple %s19, %s20
  %s22 = sld [smem:[#allocation0]]
  $region94: #{tpu_custom_call.1} parent=0
    _
  %s24 = ssub.s32 1, %s22
  %s25 = scalar_select 0, %s24, %s22
  $region1: #{tpu_custom_call.1} parent=0
    #allocation2 [shape = 'u8[8192]{0}', space=vmem, size = 0x2000, scoped, tag = 'output window, operand 0, single buffered']
    #allocation3 [shape = 's32[1]{0}', space=sflag, size = 0x4, scoped, tag = 'scoped memory for tpu_custom_call.1']
    #allocation4 [shape = 'u8[4096]{0}', space=vmem, size = 0x1000, scoped, tag = 'output window, operand 1, single buffered']
    #allocation5 [shape = 's32[1]{0}', space=sflag, size = 0x4, scoped, tag = 'scoped memory for tpu_custom_call.1']
    %26 = vsyncpa [#allocation3], 0
    %27 = vsyncpa [#allocation5], 0
    // Predicated region
    $region2: #{tpu_custom_call.1} parent=1 // pred_check
      _
    $region3: #{tpu_custom_call.1} parent=1 // pred_check_branch
      %29 = sbr.rel (0) target = $region5
    $region4: #{tpu_custom_call.1} parent=1 // pred_region
      _
    $region5: #{tpu_custom_call.1} parent=1 // pred_fallthru
      _
    // Predicated region
    $region6: #{tpu_custom_call.1} parent=1 // pred_check
      _
    $region7: #{tpu_custom_call.1} parent=1 // pred_check_branch
      %31 = sbr.rel (0) target = $region9
    $region8: #{tpu_custom_call.1} parent=1 // pred_region
      _
    $region9: #{tpu_custom_call.1} parent=1 // pred_fallthru
      _
    // Predicated region
    $region10: #{tpu_custom_call.1} parent=1 // pred_check
      _
    $region11: #{tpu_custom_call.1} parent=1 // pred_check_branch
      %33 = sbr.rel (0) target = $region13
    $region12: #{tpu_custom_call.1} parent=1 // pred_region
      _
    $region13: #{tpu_custom_call.1} parent=1 // pred_fallthru
      _
    // Predicated region
    $region14: #{tpu_custom_call.1} parent=1 // pred_check
      _
    $region15: #{tpu_custom_call.1} parent=1 // pred_check_branch
      %35 = sbr.rel (0) target = $region17
    $region16: #{tpu_custom_call.1} parent=1 // pred_region
      _
    $region17: #{tpu_custom_call.1} parent=1 // pred_fallthru
      _
    // Predicated region
    $region18: #{tpu_custom_call.1} parent=1 // pred_check
      _
    $region19: #{tpu_custom_call.1} parent=1 // pred_check_branch
      %37 = sbr.rel (0) target = $region21
    $region20: #{tpu_custom_call.1} parent=1 // pred_region
      _
    $region21: #{tpu_custom_call.1} parent=1 // pred_fallthru
      _
    // Predicated region
    $region22: #{tpu_custom_call.1} parent=1 // pred_check
      _
    $region23: #{tpu_custom_call.1} parent=1 // pred_check_branch
      %39 = sbr.rel (0) target = $region25
    $region24: #{tpu_custom_call.1} parent=1 // pred_region
      _
    $region25: #{tpu_custom_call.1} parent=1 // pred_fallthru
      _
    // Predicated region
    $region26: #{tpu_custom_call.1} parent=1 // pred_check
      _
    $region27: #{tpu_custom_call.1} parent=1 // pred_check_branch
      %41 = sbr.rel (0) target = $region29
    $region28: #{tpu_custom_call.1} parent=1 // pred_region
      _
    $region29: #{tpu_custom_call.1} parent=1 // pred_fallthru
      _
    // Predicated region
    $region30: #{tpu_custom_call.1} parent=1 // pred_check
      _
    $region31: #{tpu_custom_call.1} parent=1 // pred_check_branch
      %43 = sbr.rel (0) target = $region33
    $region32: #{tpu_custom_call.1} parent=1 // pred_region
      _
    $region33: #{tpu_custom_call.1} parent=1 // pred_fallthru
      _
    // Predicated region
    $region34: #{tpu_custom_call.1} parent=1 // pred_check
      _
    $region35: #{tpu_custom_call.1} parent=1 // pred_check_branch
      %45 = sbr.rel (0) target = $region37
    $region36: #{tpu_custom_call.1} parent=1 // pred_region
      _
    $region37: #{tpu_custom_call.1} parent=1 // pred_fallthru
      _
    // Predicated region
    $region38: #{tpu_custom_call.1} parent=1 // pred_check
      _
    $region39: #{tpu_custom_call.1} parent=1 // pred_check_branch
      %47 = sbr.rel (0) target = $region41
    $region40: #{tpu_custom_call.1} parent=1 // pred_region
      _
    $region41: #{tpu_custom_call.1} parent=1 // pred_fallthru
      _
    // Predicated region
    $region42: #{tpu_custom_call.1} parent=1 // pred_check
      _
    $region43: #{tpu_custom_call.1} parent=1 // pred_check_branch
      %49 = sbr.rel (0) target = $region45
    $region44: #{tpu_custom_call.1} parent=1 // pred_region
      _
    $region45: #{tpu_custom_call.1} parent=1 // pred_fallthru
      _
    // Predicated region
    $region46: #{tpu_custom_call.1} parent=1 // pred_check
      _
    $region47: #{tpu_custom_call.1} parent=1 // pred_check_branch
      %51 = sbr.rel (0) target = $region49
    $region48: #{tpu_custom_call.1} parent=1 // pred_region
      _
    $region49: #{tpu_custom_call.1} parent=1 // pred_fallthru
      _
    // Predicated region
    $region50: #{tpu_custom_call.1} parent=1 // pred_check
      _
    $region51: #{tpu_custom_call.1} parent=1 // pred_check_branch
      %53 = sbr.rel (0) target = $region53
    $region52: #{tpu_custom_call.1} parent=1 // pred_region
      _
    $region53: #{tpu_custom_call.1} parent=1 // pred_fallthru
      _
    // Predicated region
    $region54: #{tpu_custom_call.1} parent=1 // pred_check
      _
    $region55: #{tpu_custom_call.1} parent=1 // pred_check_branch
      %55 = sbr.rel (0) target = $region57
    $region56: #{tpu_custom_call.1} parent=1 // pred_region
      _
    $region57: #{tpu_custom_call.1} parent=1 // pred_fallthru
      _
    // Predicated region
    $region58: #{tpu_custom_call.1} parent=1 // pred_check
      _
    $region59: #{tpu_custom_call.1} parent=1 // pred_check_branch
      %57 = sbr.rel (0) target = $region61
    $region60: #{tpu_custom_call.1} parent=1 // pred_region
      _
    $region61: #{tpu_custom_call.1} parent=1 // pred_fallthru
      _
    // Predicated region
    $region62: #{tpu_custom_call.1} parent=1 // pred_check
      _
    $region63: #{tpu_custom_call.1} parent=1 // pred_check_branch
      %59 = sbr.rel (0) target = $region65
    $region64: #{tpu_custom_call.1} parent=1 // pred_region
      _
    $region65: #{tpu_custom_call.1} parent=1 // pred_fallthru
      _
    // Predicated region
    $region66: #{tpu_custom_call.1} parent=1 // pred_check
      _
    $region67: #{tpu_custom_call.1} parent=1 // pred_check_branch
      %61 = sbr.rel (0) target = $region69
    $region68: #{tpu_custom_call.1} parent=1 // pred_region
      _
    $region69: #{tpu_custom_call.1} parent=1 // pred_fallthru
      _
    // Predicated region
    $region70: #{tpu_custom_call.1} parent=1 // pred_check
      _
    $region71: #{tpu_custom_call.1} parent=1 // pred_check_branch
      %63 = sbr.rel (0) target = $region73
    $region72: #{tpu_custom_call.1} parent=1 // pred_region
      _
    $region73: #{tpu_custom_call.1} parent=1 // pred_fallthru
      _
    // Predicated region
    $region74: #{tpu_custom_call.1} parent=1 // pred_check
      _
    $region75: #{tpu_custom_call.1} parent=1 // pred_check_branch
      %65 = sbr.rel (0) target = $region77
    $region76: #{tpu_custom_call.1} parent=1 // pred_region
      _
    $region77: #{tpu_custom_call.1} parent=1 // pred_fallthru
      _
    %v66 = vld [vmem:[%s2] sm:$0xff]
    %v67 = vld [vmem:[%s2 + $0x8] sm:$0xff]
    %v68 = vld [vmem:[%s2 + $0x10] sm:$0xff]
    %v69 = vld [vmem:[%s2 + $0x18] sm:$0xff]
    %v70 = vld [vmem:[%s3] sm:$0xff]
    %v71 = vld [vmem:[%s3 + $0x8] sm:$0xff]
    %v72 = vld [vmem:[%s3 + $0x10] sm:$0xff]
    %v73 = vld [vmem:[%s3 + $0x18] sm:$0xff]
    %v74 = vld [vmem:[%s4] sm:$0xff]
    %v75 = vld [vmem:[%s4 + $0x8] sm:$0xff]
    %v76 = vld [vmem:[%s4 + $0x10] sm:$0xff]
    %v77 = vld [vmem:[%s4 + $0x18] sm:$0xff]
    %v78 = vld [vmem:[%s4 + $0x20] sm:$0xff]
    %v79 = vld [vmem:[%s4 + $0x28] sm:$0xff]
    %v80 = vld [vmem:[%s4 + $0x30] sm:$0xff]
    %v81 = vld [vmem:[%s4 + $0x38] sm:$0xff]
    %v82 = vld [vmem:[%s5] sm:$0xff]
    %v83 = vld [vmem:[%s5 + $0x8] sm:$0xff]
    %v84 = vld [vmem:[%s5 + $0x10] sm:$0xff]
    %v85 = vld [vmem:[%s5 + $0x18] sm:$0xff]
    %v86 = vld [vmem:[%s5 + $0x20] sm:$0xff]
    %v87 = vld [vmem:[%s5 + $0x28] sm:$0xff]
    %v88 = vld [vmem:[%s5 + $0x30] sm:$0xff]
    %v89 = vld [vmem:[%s5 + $0x38] sm:$0xff]
    %v90 = vld [vmem:[%s6] sm:$0xff]
    %v91 = vld [vmem:[%s6 + $0x8] sm:$0xff]
    %v92 = vld [vmem:[%s6 + $0x10] sm:$0xff]
    %v93 = vld [vmem:[%s6 + $0x18] sm:$0xff]
    %v94 = vld [vmem:[%s6 + $0x20] sm:$0xff]
    %v95 = vld [vmem:[%s6 + $0x28] sm:$0xff]
    %v96 = vld [vmem:[%s6 + $0x30] sm:$0xff]
    %v97 = vld [vmem:[%s6 + $0x38] sm:$0xff]
    %v98 = vld [vmem:[%s6 + $0x40] sm:$0xff]
    %v99 = vld [vmem:[%s6 + $0x48] sm:$0xff]
    %v100 = vld [vmem:[%s6 + $0x50] sm:$0xff]
    %v101 = vld [vmem:[%s6 + $0x58] sm:$0xff]
    %v102 = vld [vmem:[%s6 + $0x60] sm:$0xff]
    %v103 = vld [vmem:[%s6 + $0x68] sm:$0xff]
    %v104 = vld [vmem:[%s6 + $0x70] sm:$0xff]
    %v105 = vld [vmem:[%s6 + $0x78] sm:$0xff]
    %v106 = vld [vmem:[%s7] sm:$0xff]
    %v107 = vld [vmem:[%s7 + $0x8] sm:$0xff]
    %v108 = vld [vmem:[%s7 + $0x10] sm:$0xff]
    %v109 = vld [vmem:[%s7 + $0x18] sm:$0xff]
    %v110 = vld [vmem:[%s7 + $0x20] sm:$0xff]
    %v111 = vld [vmem:[%s7 + $0x28] sm:$0xff]
    %v112 = vld [vmem:[%s7 + $0x30] sm:$0xff]
    %v113 = vld [vmem:[%s7 + $0x38] sm:$0xff]
    %v114 = vld [vmem:[%s7 + $0x40] sm:$0xff]
    %v115 = vld [vmem:[%s7 + $0x48] sm:$0xff]
    %v116 = vld [vmem:[%s7 + $0x50] sm:$0xff]
    %v117 = vld [vmem:[%s7 + $0x58] sm:$0xff]
    %v118 = vld [vmem:[%s7 + $0x60] sm:$0xff]
    %v119 = vld [vmem:[%s7 + $0x68] sm:$0xff]
    %v120 = vld [vmem:[%s7 + $0x70] sm:$0xff]
    %v121 = vld [vmem:[%s7 + $0x78] sm:$0xff]
    %v122 = vld [vmem:[%s8] sm:$0xff]
    %v123 = vld [vmem:[%s8 + $0x8] sm:$0xff]
    %v124 = vld [vmem:[%s8 + $0x10] sm:$0xff]
    %v125 = vld [vmem:[%s8 + $0x18] sm:$0xff]
    %v126 = vld [vmem:[%s8 + $0x20] sm:$0xff]
    %v127 = vld [vmem:[%s8 + $0x28] sm:$0xff]
    %v128 = vld [vmem:[%s8 + $0x30] sm:$0xff]
    %v129 = vld [vmem:[%s8 + $0x38] sm:$0xff]
    %v130 = vld [vmem:[%s8 + $0x40] sm:$0xff]
    %v131 = vld [vmem:[%s8 + $0x48] sm:$0xff]
    %v132 = vld [vmem:[%s8 + $0x50] sm:$0xff]
    %v133 = vld [vmem:[%s8 + $0x58] sm:$0xff]
    %v134 = vld [vmem:[%s8 + $0x60] sm:$0xff]
    %v135 = vld [vmem:[%s8 + $0x68] sm:$0xff]
    %v136 = vld [vmem:[%s8 + $0x70] sm:$0xff]
    %v137 = vld [vmem:[%s8 + $0x78] sm:$0xff]
    %v138 = vld [vmem:[%s9] sm:$0xff]
    %v139 = vld [vmem:[%s9 + $0x8] sm:$0xff]
    %v140 = vld [vmem:[%s9 + $0x10] sm:$0xff]
    %v141 = vld [vmem:[%s9 + $0x18] sm:$0xff]
    %v142 = vld [vmem:[%s9 + $0x20] sm:$0xff]
    %v143 = vld [vmem:[%s9 + $0x28] sm:$0xff]
    %v144 = vld [vmem:[%s9 + $0x30] sm:$0xff]
    %v145 = vld [vmem:[%s9 + $0x38] sm:$0xff]
    %v146 = vld [vmem:[%s9 + $0x40] sm:$0xff]
    %v147 = vld [vmem:[%s9 + $0x48] sm:$0xff]
    %v148 = vld [vmem:[%s9 + $0x50] sm:$0xff]
    %v149 = vld [vmem:[%s9 + $0x58] sm:$0xff]
    %v150 = vld [vmem:[%s9 + $0x60] sm:$0xff]
    %v151 = vld [vmem:[%s9 + $0x68] sm:$0xff]
    %v152 = vld [vmem:[%s9 + $0x70] sm:$0xff]
    %v153 = vld [vmem:[%s9 + $0x78] sm:$0xff]
    %v154 = vld [vmem:[%s10] sm:$0xff]
    %v155 = vld [vmem:[%s10 + $0x8] sm:$0xff]
    %v156 = vld [vmem:[%s10 + $0x10] sm:$0xff]
    %v157 = vld [vmem:[%s10 + $0x18] sm:$0xff]
    %v158 = vld [vmem:[%s10 + $0x20] sm:$0xff]
    %v159 = vld [vmem:[%s10 + $0x28] sm:$0xff]
    %v160 = vld [vmem:[%s10 + $0x30] sm:$0xff]
    %v161 = vld [vmem:[%s10 + $0x38] sm:$0xff]
    %v162 = vld [vmem:[%s11] sm:$0xff]
    %v163 = vld [vmem:[%s11 + $0x8] sm:$0xff]
    %v164 = vld [vmem:[%s11 + $0x10] sm:$0xff]
    %v165 = vld [vmem:[%s11 + $0x18] sm:$0xff]
    %v166 = vld [vmem:[%s11 + $0x20] sm:$0xff]
    %v167 = vld [vmem:[%s11 + $0x28] sm:$0xff]
    %v168 = vld [vmem:[%s11 + $0x30] sm:$0xff]
    %v169 = vld [vmem:[%s11 + $0x38] sm:$0xff]
    %v170 = vld [vmem:[%s12] sm:$0xff]
    %v171 = vld [vmem:[%s12 + $0x8] sm:$0xff]
    %v172 = vld [vmem:[%s12 + $0x10] sm:$0xff]
    %v173 = vld [vmem:[%s12 + $0x18] sm:$0xff]
    %v174 = vld [vmem:[%s12 + $0x20] sm:$0xff]
    %v175 = vld [vmem:[%s12 + $0x28] sm:$0xff]
    %v176 = vld [vmem:[%s12 + $0x30] sm:$0xff]
    %v177 = vld [vmem:[%s12 + $0x38] sm:$0xff]
    %v178 = vld [vmem:[%s12 + $0x40] sm:$0xff]
    %v179 = vld [vmem:[%s12 + $0x48] sm:$0xff]
    %v180 = vld [vmem:[%s12 + $0x50] sm:$0xff]
    %v181 = vld [vmem:[%s12 + $0x58] sm:$0xff]
    %v182 = vld [vmem:[%s12 + $0x60] sm:$0xff]
    %v183 = vld [vmem:[%s12 + $0x68] sm:$0xff]
    %v184 = vld [vmem:[%s12 + $0x70] sm:$0xff]
    %v185 = vld [vmem:[%s12 + $0x78] sm:$0xff]
    %v186 = vld [vmem:[%s13] sm:$0xff]
    %v187 = vld [vmem:[%s13 + $0x8] sm:$0xff]
    %v188 = vld [vmem:[%s13 + $0x10] sm:$0xff]
    %v189 = vld [vmem:[%s13 + $0x18] sm:$0xff]
    %v190 = vld [vmem:[%s13 + $0x20] sm:$0xff]
    %v191 = vld [vmem:[%s13 + $0x28] sm:$0xff]
    %v192 = vld [vmem:[%s13 + $0x30] sm:$0xff]
    %v193 = vld [vmem:[%s13 + $0x38] sm:$0xff]
    %v194 = vld [vmem:[%s13 + $0x40] sm:$0xff]
    %v195 = vld [vmem:[%s13 + $0x48] sm:$0xff]
    %v196 = vld [vmem:[%s13 + $0x50] sm:$0xff]
    %v197 = vld [vmem:[%s13 + $0x58] sm:$0xff]
    %v198 = vld [vmem:[%s13 + $0x60] sm:$0xff]
    %v199 = vld [vmem:[%s13 + $0x68] sm:$0xff]
    %v200 = vld [vmem:[%s13 + $0x70] sm:$0xff]
    %v201 = vld [vmem:[%s13 + $0x78] sm:$0xff]
    %v202 = vld [vmem:[%s14] sm:$0xff]
    %v203 = vld [vmem:[%s14 + $0x8] sm:$0xff]
    %v204 = vld [vmem:[%s14 + $0x10] sm:$0xff]
    %v205 = vld [vmem:[%s14 + $0x18] sm:$0xff]
    %v206 = vld [vmem:[%s14 + $0x20] sm:$0xff]
    %v207 = vld [vmem:[%s14 + $0x28] sm:$0xff]
    %v208 = vld [vmem:[%s14 + $0x30] sm:$0xff]
    %v209 = vld [vmem:[%s14 + $0x38] sm:$0xff]
    %v210 = vld [vmem:[%s14 + $0x40] sm:$0xff]
    %v211 = vld [vmem:[%s14 + $0x48] sm:$0xff]
    %v212 = vld [vmem:[%s14 + $0x50] sm:$0xff]
    %v213 = vld [vmem:[%s14 + $0x58] sm:$0xff]
    %v214 = vld [vmem:[%s14 + $0x60] sm:$0xff]
    %v215 = vld [vmem:[%s14 + $0x68] sm:$0xff]
    %v216 = vld [vmem:[%s14 + $0x70] sm:$0xff]
    %v217 = vld [vmem:[%s14 + $0x78] sm:$0xff]
    %v218 = vld [vmem:[%s15] sm:$0xff]
    %v219 = vld [vmem:[%s15 + $0x8] sm:$0xff]
    %v220 = vld [vmem:[%s15 + $0x10] sm:$0xff]
    %v221 = vld [vmem:[%s15 + $0x18] sm:$0xff]
    %v222 = vld [vmem:[%s15 + $0x20] sm:$0xff]
    %v223 = vld [vmem:[%s15 + $0x28] sm:$0xff]
    %v224 = vld [vmem:[%s15 + $0x30] sm:$0xff]
    %v225 = vld [vmem:[%s15 + $0x38] sm:$0xff]
    %v226 = vld [vmem:[%s15 + $0x40] sm:$0xff]
    %v227 = vld [vmem:[%s15 + $0x48] sm:$0xff]
    %v228 = vld [vmem:[%s15 + $0x50] sm:$0xff]
    %v229 = vld [vmem:[%s15 + $0x58] sm:$0xff]
    %v230 = vld [vmem:[%s15 + $0x60] sm:$0xff]
    %v231 = vld [vmem:[%s15 + $0x68] sm:$0xff]
    %v232 = vld [vmem:[%s15 + $0x70] sm:$0xff]
    %v233 = vld [vmem:[%s15 + $0x78] sm:$0xff]
    %v234 = vld [vmem:[%s16] sm:$0xff]
    %v235 = vld [vmem:[%s16 + $0x8] sm:$0xff]
    %v236 = vld [vmem:[%s16 + $0x10] sm:$0xff]
    %v237 = vld [vmem:[%s16 + $0x18] sm:$0xff]
    %v238 = vld [vmem:[%s16 + $0x20] sm:$0xff]
    %v239 = vld [vmem:[%s16 + $0x28] sm:$0xff]
    %v240 = vld [vmem:[%s16 + $0x30] sm:$0xff]
    %v241 = vld [vmem:[%s16 + $0x38] sm:$0xff]
    %v242 = vld [vmem:[%s17] sm:$0xff]
    %v243 = vld [vmem:[%s17 + $0x8] sm:$0xff]
    %v244 = vld [vmem:[%s17 + $0x10] sm:$0xff]
    %v245 = vld [vmem:[%s17 + $0x18] sm:$0xff]
    %v246 = vld [vmem:[%s17 + $0x20] sm:$0xff]
    %v247 = vld [vmem:[%s17 + $0x28] sm:$0xff]
    %v248 = vld [vmem:[%s17 + $0x30] sm:$0xff]
    %v249 = vld [vmem:[%s17 + $0x38] sm:$0xff]
    %v250 = vld [vmem:[%s17 + $0x40] sm:$0xff]
    %v251 = vld [vmem:[%s17 + $0x48] sm:$0xff]
    %v252 = vld [vmem:[%s17 + $0x50] sm:$0xff]
    %v253 = vld [vmem:[%s17 + $0x58] sm:$0xff]
    %v254 = vld [vmem:[%s17 + $0x60] sm:$0xff]
    %v255 = vld [vmem:[%s17 + $0x68] sm:$0xff]
    %v256 = vld [vmem:[%s17 + $0x70] sm:$0xff]
    %v257 = vld [vmem:[%s17 + $0x78] sm:$0xff]
    %v258 = vld [vmem:[%s0] sm:$0xff]
    %v259 = vld [vmem:[%s1] sm:$0xff]
    %v260 = vld [vmem:[%s18] ss:$0 sm:$0xff]
    %vm261 = vcmask 261120
    %v263 = vsel %vm261, %v258, 0
    %265 = vmatprep.subr.mxu0 0.0
    %266 = vmatpush1.msra.mxu0 %v66
    %267 = vmatprep.subr.mxu0 0.0
    %268 = vmatpush1.msra.mxu0 %v67
    %269 = vmatprep.subr.mxu0 0.0
    %270 = vmatpush1.msra.mxu0 %v68
    %271 = vmatprep.subr.mxu0 0.0
    %272 = vmatpush1.msra.mxu0 %v69
    %273 = vmatprep.subr.mxu0 0.0
    %274 = vmatpush1.msra.mxu0 0.0
    %275 = vmatprep.subr.mxu0 0.0
    %276 = vmatpush1.msra.mxu0 0.0
    %277 = vmatprep.subr.mxu0 0.0
    %278 = vmatpush1.msra.mxu0 0.0
    %279 = vmatprep.subr.mxu0 0.0
    %280 = vmatpush1.msra.mxu0 0.0
    %281 = vmatprep.subr.mxu0 0.0
    %282 = vmatpush1.msra.mxu0 0.0
    %283 = vmatprep.subr.mxu0 0.0
    %284 = vmatpush1.msra.mxu0 0.0
    %285 = vmatprep.subr.mxu0 0.0
    %286 = vmatpush1.msra.mxu0 0.0
    %287 = vmatprep.subr.mxu0 0.0
    %288 = vmatpush1.msra.mxu0 0.0
    %289 = vmatprep.subr.mxu0 0.0
    %290 = vmatpush1.msra.mxu0 0.0
    %291 = vmatprep.subr.mxu0 0.0
    %292 = vmatpush1.msra.mxu0 0.0
    %293 = vmatprep.subr.mxu0 0.0
    %294 = vmatpush1.msra.mxu0 0.0
    %295 = vmatprep.subr.mxu0 0.0
    %296 = vmatpush1.msra.mxu0 0.0
    %297 = vmatprep.subr.mxu0 0.0
    %298 = vmatpush1.msra.mxu0 0.0
    %299 = vmatprep.subr.mxu0 0.0
    %300 = vmatpush1.msra.mxu0 0.0
    %301 = vmatprep.subr.mxu0 0.0
    %302 = vmatpush1.msra.mxu0 0.0
    %303 = vmatprep.subr.mxu0 0.0
    %304 = vmatpush1.msra.mxu0 0.0
    %305 = vmatprep.subr.mxu0 0.0
    %306 = vmatpush1.msra.mxu0 0.0
    %307 = vmatprep.subr.mxu0 0.0
    %308 = vmatpush1.msra.mxu0 0.0
    %309 = vmatprep.subr.mxu0 0.0
    %310 = vmatpush1.msra.mxu0 0.0
    %311 = vmatprep.subr.mxu0 0.0
    %312 = vmatpush1.msra.mxu0 0.0
    %313 = vmatprep.subr.mxu0 0.0
    %314 = vmatpush1.msra.mxu0 0.0
    %315 = vmatprep.subr.mxu0 0.0
    %316 = vmatpush1.msra.mxu0 0.0
    %317 = vmatprep.subr.mxu0 0.0
    %318 = vmatpush1.msra.mxu0 0.0
    %319 = vmatprep.subr.mxu0 0.0
    %320 = vmatpush1.msra.mxu0 0.0
    %321 = vmatprep.subr.mxu0 0.0
    %322 = vmatpush1.msra.mxu0 0.0
    %323 = vmatprep.subr.mxu0 0.0
    %324 = vmatpush1.msra.mxu0 0.0
    %325 = vmatprep.subr.mxu0 0.0
    %326 = vmatpush1.msra.mxu0 0.0
    %327 = vmatprep.subr.mxu0 0.0
    %328 = vmatpush1.msra.mxu0 0.0
    %329 = vmatprep.mubr.f32.mxu0 0.0
    %330 = vmatmul.mubr.f32.gmra.mrb[0].mxu0 %v263
    %v331 = vpop.f32.mrb[0].mxu0
    %v332 = vadd.f32 %v260, %v331
    %v333 = vpop.f32.mrb[0].mxu0
    %334 = vdwg.mxu0
    %v335 = vmax.f32 %v332, 0.0
    %v336 = vld [vmem:[%s18 + $0x1] ss:$0 sm:$0xff]
    %v337 = vld [vmem:[%s18 + $0x2] ss:$0 sm:$0xff]
    %v338 = vsel %vm261, %v335, 0.0
    %339 = vadd.xlane.f32.xlu0 %v338
    %v340 = vpop.xlane.xlu0 %339
    %v341 = vrcp.pop 32.0
    %v342 = vmul.f32 %v340, %v341
    %v343 = vsub.f32 %v335, %v342
    %v344 = vmul.f32 %v343, %v343
    %v345 = vsel %vm261, %v344, 0.0
    %346 = vadd.xlane.f32.xlu0 %v345
    %v347 = vpop.xlane.xlu0 %346
    %v348 = vmul.f32 %v347, %v341
    %v349 = vadd.f32 %v348, 1e-05
    %v350 = vrsqrt.pop %v349
    %v351 = vmul.f32 %v343, %v350
    %v352 = vmul.f32 %v351, %v336
    %v353 = vadd.f32 %v352, %v337
    %v354 = vld [vmem:[%s18 + $0x3] ss:$0 sm:$0xff]
    %v356 = vsel %vm261, %v259, 0
    %358 = vmatprep.subr.mxu0 0.0
    %359 = vmatpush1.msra.mxu0 %v70
    %360 = vmatprep.subr.mxu0 0.0
    %361 = vmatpush1.msra.mxu0 %v71
    %362 = vmatprep.subr.mxu0 0.0
    %363 = vmatpush1.msra.mxu0 %v72
    %364 = vmatprep.subr.mxu0 0.0
    %365 = vmatpush1.msra.mxu0 %v73
    %366 = vmatprep.subr.mxu0 0.0
    %367 = vmatpush1.msra.mxu0 0.0
    %368 = vmatprep.subr.mxu0 0.0
    %369 = vmatpush1.msra.mxu0 0.0
    %370 = vmatprep.subr.mxu0 0.0
    %371 = vmatpush1.msra.mxu0 0.0
    %372 = vmatprep.subr.mxu0 0.0
    %373 = vmatpush1.msra.mxu0 0.0
    %374 = vmatprep.subr.mxu0 0.0
    %375 = vmatpush1.msra.mxu0 0.0
    %376 = vmatprep.subr.mxu0 0.0
    %377 = vmatpush1.msra.mxu0 0.0
    %378 = vmatprep.subr.mxu0 0.0
    %379 = vmatpush1.msra.mxu0 0.0
    %380 = vmatprep.subr.mxu0 0.0
    %381 = vmatpush1.msra.mxu0 0.0
    %382 = vmatprep.subr.mxu0 0.0
    %383 = vmatpush1.msra.mxu0 0.0
    %384 = vmatprep.subr.mxu0 0.0
    %385 = vmatpush1.msra.mxu0 0.0
    %386 = vmatprep.subr.mxu0 0.0
    %387 = vmatpush1.msra.mxu0 0.0
    %388 = vmatprep.subr.mxu0 0.0
    %389 = vmatpush1.msra.mxu0 0.0
    %390 = vmatprep.subr.mxu0 0.0
    %391 = vmatpush1.msra.mxu0 0.0
    %392 = vmatprep.subr.mxu0 0.0
    %393 = vmatpush1.msra.mxu0 0.0
    %394 = vmatprep.subr.mxu0 0.0
    %395 = vmatpush1.msra.mxu0 0.0
    %396 = vmatprep.subr.mxu0 0.0
    %397 = vmatpush1.msra.mxu0 0.0
    %398 = vmatprep.subr.mxu0 0.0
    %399 = vmatpush1.msra.mxu0 0.0
    %400 = vmatprep.subr.mxu0 0.0
    %401 = vmatpush1.msra.mxu0 0.0
    %402 = vmatprep.subr.mxu0 0.0
    %403 = vmatpush1.msra.mxu0 0.0
    %404 = vmatprep.subr.mxu0 0.0
    %405 = vmatpush1.msra.mxu0 0.0
    %406 = vmatprep.subr.mxu0 0.0
    %407 = vmatpush1.msra.mxu0 0.0
    %408 = vmatprep.subr.mxu0 0.0
    %409 = vmatpush1.msra.mxu0 0.0
    %410 = vmatprep.subr.mxu0 0.0
    %411 = vmatpush1.msra.mxu0 0.0
    %412 = vmatprep.subr.mxu0 0.0
    %413 = vmatpush1.msra.mxu0 0.0
    %414 = vmatprep.subr.mxu0 0.0
    %415 = vmatpush1.msra.mxu0 0.0
    %416 = vmatprep.subr.mxu0 0.0
    %417 = vmatpush1.msra.mxu0 0.0
    %418 = vmatprep.subr.mxu0 0.0
    %419 = vmatpush1.msra.mxu0 0.0
    %420 = vmatprep.subr.mxu0 0.0
    %421 = vmatpush1.msra.mxu0 0.0
    %422 = vmatprep.mubr.f32.mxu0 0.0
    %423 = vmatmul.mubr.f32.gmra.mrb[0].mxu0 %v356
    %v424 = vpop.f32.mrb[0].mxu0
    %v425 = vadd.f32 %v354, %v424
    %v426 = vpop.f32.mrb[0].mxu0
    %427 = vdwg.mxu0
    %v428 = vmax.f32 %v425, 0.0
    %v429 = vld [vmem:[%s18 + $0x4] ss:$0 sm:$0xff]
    %v430 = vld [vmem:[%s18 + $0x5] ss:$0 sm:$0xff]
    %v431 = vsel %vm261, %v428, 0.0
    %432 = vadd.xlane.f32.xlu0 %v431
    %v433 = vpop.xlane.xlu0 %432
    %v434 = vmul.f32 %v433, %v341
    %v435 = vsub.f32 %v428, %v434
    %v436 = vmul.f32 %v435, %v435
    %v437 = vsel %vm261, %v436, 0.0
    %438 = vadd.xlane.f32.xlu0 %v437
    %v439 = vpop.xlane.xlu0 %438
    %v440 = vmul.f32 %v439, %v341
    %v441 = vadd.f32 %v440, 1e-05
    %v442 = vrsqrt.pop %v441
    %v443 = vmul.f32 %v435, %v442
    %v444 = vmul.f32 %v443, %v429
    %v445 = vadd.f32 %v444, %v430
    %447 = vrot.lane.b32.xlu0 %v445, 32
    %v448 = vpop.permute.xlu0 %447
    %v450 = vsel %vm261, %v353, %v448
    %v451 = vld [vmem:[%s18 + $0x6] ss:$0 sm:$0xff]
    %v452 = vld [vmem:[%s18 + $0x7] ss:$0 sm:$0xff]
    %v453 = vld [vmem:[%s18 + $0x10] ss:$0 sm:$0xff]
    %v454 = vld [vmem:[%s18 + $0x11] ss:$0 sm:$0xff]
    %v455 = vld [vmem:[%s18 + $0x12] ss:$0 sm:$0xff]
    %v456 = vld [vmem:[%s18 + $0x13] ss:$0 sm:$0xff]
    %vm457 = vcmask 523264
    %v459 = vsel %vm457, %v450, 0
    %461 = vmatprep.subr.mxu0 0.0
    %462 = vmatpush1.msra.mxu0 %v74
    %463 = vmatprep.subr.mxu0 0.0
    %464 = vmatpush1.msra.mxu0 %v75
    %465 = vmatprep.subr.mxu0 0.0
    %466 = vmatpush1.msra.mxu0 %v76
    %467 = vmatprep.subr.mxu0 0.0
    %468 = vmatpush1.msra.mxu0 %v77
    %469 = vmatprep.subr.mxu0 0.0
    %470 = vmatpush1.msra.mxu0 %v78
    %471 = vmatprep.subr.mxu0 0.0
    %472 = vmatpush1.msra.mxu0 %v79
    %473 = vmatprep.subr.mxu0 0.0
    %474 = vmatpush1.msra.mxu0 %v80
    %475 = vmatprep.subr.mxu0 0.0
    %476 = vmatpush1.msra.mxu0 %v81
    %477 = vmatprep.subr.mxu0 0.0
    %478 = vmatpush1.msra.mxu0 0.0
    %479 = vmatprep.subr.mxu0 0.0
    %480 = vmatpush1.msra.mxu0 0.0
    %481 = vmatprep.subr.mxu0 0.0
    %482 = vmatpush1.msra.mxu0 0.0
    %483 = vmatprep.subr.mxu0 0.0
    %484 = vmatpush1.msra.mxu0 0.0
    %485 = vmatprep.subr.mxu0 0.0
    %486 = vmatpush1.msra.mxu0 0.0
    %487 = vmatprep.subr.mxu0 0.0
    %488 = vmatpush1.msra.mxu0 0.0
    %489 = vmatprep.subr.mxu0 0.0
    %490 = vmatpush1.msra.mxu0 0.0
    %491 = vmatprep.subr.mxu0 0.0
    %492 = vmatpush1.msra.mxu0 0.0
    %493 = vmatprep.subr.mxu0 0.0
    %494 = vmatpush1.msra.mxu0 0.0
    %495 = vmatprep.subr.mxu0 0.0
    %496 = vmatpush1.msra.mxu0 0.0
    %497 = vmatprep.subr.mxu0 0.0
    %498 = vmatpush1.msra.mxu0 0.0
    %499 = vmatprep.subr.mxu0 0.0
    %500 = vmatpush1.msra.mxu0 0.0
    %501 = vmatprep.subr.mxu0 0.0
    %502 = vmatpush1.msra.mxu0 0.0
    %503 = vmatprep.subr.mxu0 0.0
    %504 = vmatpush1.msra.mxu0 0.0
    %505 = vmatprep.subr.mxu0 0.0
    %506 = vmatpush1.msra.mxu0 0.0
    %507 = vmatprep.subr.mxu0 0.0
    %508 = vmatpush1.msra.mxu0 0.0
    %509 = vmatprep.subr.mxu0 0.0
    %510 = vmatpush1.msra.mxu0 0.0
    %511 = vmatprep.subr.mxu0 0.0
    %512 = vmatpush1.msra.mxu0 0.0
    %513 = vmatprep.subr.mxu0 0.0
    %514 = vmatpush1.msra.mxu0 0.0
    %515 = vmatprep.subr.mxu0 0.0
    %516 = vmatpush1.msra.mxu0 0.0
    %517 = vmatprep.subr.mxu0 0.0
    %518 = vmatpush1.msra.mxu0 0.0
    %519 = vmatprep.subr.mxu0 0.0
    %520 = vmatpush1.msra.mxu0 0.0
    %521 = vmatprep.subr.mxu0 0.0
    %522 = vmatpush1.msra.mxu0 0.0
    %523 = vmatprep.subr.mxu0 0.0
    %524 = vmatpush1.msra.mxu0 0.0
    %525 = vmatprep.mubr.f32.mxu0 0.0
    %526 = vmatmul.mubr.f32.gmra.mrb[0].mxu0 %v459
    %v527 = vpop.f32.mrb[0].mxu0
    %v528 = vadd.f32 0.0, %v527
    %v529 = vpop.f32.mrb[0].mxu0
    %530 = vdwg.mxu0
    %531 = vmatprep.subr.mxu0 0.0
    %532 = vmatpush1.msra.mxu0 %v82
    %533 = vmatprep.subr.mxu0 0.0
    %534 = vmatpush1.msra.mxu0 %v83
    %535 = vmatprep.subr.mxu0 0.0
    %536 = vmatpush1.msra.mxu0 %v84
    %537 = vmatprep.subr.mxu0 0.0
    %538 = vmatpush1.msra.mxu0 %v85
    %539 = vmatprep.subr.mxu0 0.0
    %540 = vmatpush1.msra.mxu0 %v86
    %541 = vmatprep.subr.mxu0 0.0
    %542 = vmatpush1.msra.mxu0 %v87
    %543 = vmatprep.subr.mxu0 0.0
    %544 = vmatpush1.msra.mxu0 %v88
    %545 = vmatprep.subr.mxu0 0.0
    %546 = vmatpush1.msra.mxu0 %v89
    %547 = vmatprep.subr.mxu0 0.0
    %548 = vmatpush1.msra.mxu0 0.0
    %549 = vmatprep.subr.mxu0 0.0
    %550 = vmatpush1.msra.mxu0 0.0
    %551 = vmatprep.subr.mxu0 0.0
    %552 = vmatpush1.msra.mxu0 0.0
    %553 = vmatprep.subr.mxu0 0.0
    %554 = vmatpush1.msra.mxu0 0.0
    %555 = vmatprep.subr.mxu0 0.0
    %556 = vmatpush1.msra.mxu0 0.0
    %557 = vmatprep.subr.mxu0 0.0
    %558 = vmatpush1.msra.mxu0 0.0
    %559 = vmatprep.subr.mxu0 0.0
    %560 = vmatpush1.msra.mxu0 0.0
    %561 = vmatprep.subr.mxu0 0.0
    %562 = vmatpush1.msra.mxu0 0.0
    %563 = vmatprep.subr.mxu0 0.0
    %564 = vmatpush1.msra.mxu0 0.0
    %565 = vmatprep.subr.mxu0 0.0
    %566 = vmatpush1.msra.mxu0 0.0
    %567 = vmatprep.subr.mxu0 0.0
    %568 = vmatpush1.msra.mxu0 0.0
    %569 = vmatprep.subr.mxu0 0.0
    %570 = vmatpush1.msra.mxu0 0.0
    %571 = vmatprep.subr.mxu0 0.0
    %572 = vmatpush1.msra.mxu0 0.0
    %573 = vmatprep.subr.mxu0 0.0
    %574 = vmatpush1.msra.mxu0 0.0
    %575 = vmatprep.subr.mxu0 0.0
    %576 = vmatpush1.msra.mxu0 0.0
    %577 = vmatprep.subr.mxu0 0.0
    %578 = vmatpush1.msra.mxu0 0.0
    %579 = vmatprep.subr.mxu0 0.0
    %580 = vmatpush1.msra.mxu0 0.0
    %581 = vmatprep.subr.mxu0 0.0
    %582 = vmatpush1.msra.mxu0 0.0
    %583 = vmatprep.subr.mxu0 0.0
    %584 = vmatpush1.msra.mxu0 0.0
    %585 = vmatprep.subr.mxu0 0.0
    %586 = vmatpush1.msra.mxu0 0.0
    %587 = vmatprep.subr.mxu0 0.0
    %588 = vmatpush1.msra.mxu0 0.0
    %589 = vmatprep.subr.mxu0 0.0
    %590 = vmatpush1.msra.mxu0 0.0
    %591 = vmatprep.subr.mxu0 0.0
    %592 = vmatpush1.msra.mxu0 0.0
    %593 = vmatprep.subr.mxu0 0.0
    %594 = vmatpush1.msra.mxu0 0.0
    %595 = vmatprep.mubr.f32.mxu0 0.0
    %596 = vmatmul.mubr.f32.gmra.mrb[0].mxu0 %v459
    %v597 = vpop.f32.mrb[0].mxu0
    %v598 = vadd.f32 0.0, %v597
    %v599 = vpop.f32.mrb[0].mxu0
    %600 = vdwg.mxu0
    %v601 = vmul.f32 %v528, %v451
    %v602 = vadd.f32 %v601, %v452
    %v603 = vxor.u32 %v602, 2147483648
    %v604 = vmul.f32 %v603, 1.442695
    %v605 = vpow.pop %v604
    %v606 = vadd.f32 %v605, 1.0
    %v607 = vrcp.pop %v606
    %v608 = vmul.f32 1.0, %v607
    %v609 = vmul.f32 %v602, %v608
    %610 = vmatprep.subr.mxu0 0.0
    %611 = vmatpush1.msra.mxu0 %v90
    %612 = vmatprep.subr.mxu0 0.0
    %613 = vmatpush1.msra.mxu0 %v91
    %614 = vmatprep.subr.mxu0 0.0
    %615 = vmatpush1.msra.mxu0 %v92
    %616 = vmatprep.subr.mxu0 0.0
    %617 = vmatpush1.msra.mxu0 %v93
    %618 = vmatprep.subr.mxu0 0.0
    %619 = vmatpush1.msra.mxu0 %v94
    %620 = vmatprep.subr.mxu0 0.0
    %621 = vmatpush1.msra.mxu0 %v95
    %622 = vmatprep.subr.mxu0 0.0
    %623 = vmatpush1.msra.mxu0 %v96
    %624 = vmatprep.subr.mxu0 0.0
    %625 = vmatpush1.msra.mxu0 %v97
    %626 = vmatprep.subr.mxu0 0.0
    %627 = vmatpush1.msra.mxu0 %v98
    %628 = vmatprep.subr.mxu0 0.0
    %629 = vmatpush1.msra.mxu0 %v99
    %630 = vmatprep.subr.mxu0 0.0
    %631 = vmatpush1.msra.mxu0 %v100
    %632 = vmatprep.subr.mxu0 0.0
    %633 = vmatpush1.msra.mxu0 %v101
    %634 = vmatprep.subr.mxu0 0.0
    %635 = vmatpush1.msra.mxu0 %v102
    %636 = vmatprep.subr.mxu0 0.0
    %637 = vmatpush1.msra.mxu0 %v103
    %638 = vmatprep.subr.mxu0 0.0
    %639 = vmatpush1.msra.mxu0 %v104
    %640 = vmatprep.subr.mxu0 0.0
    %641 = vmatpush1.msra.mxu0 %v105
    %642 = vmatprep.subr.mxu0 0.0
    %643 = vmatpush1.msra.mxu0 0.0
    %644 = vmatprep.subr.mxu0 0.0
    %645 = vmatpush1.msra.mxu0 0.0
    %646 = vmatprep.subr.mxu0 0.0
    %647 = vmatpush1.msra.mxu0 0.0
    %648 = vmatprep.subr.mxu0 0.0
    %649 = vmatpush1.msra.mxu0 0.0
    %650 = vmatprep.subr.mxu0 0.0
    %651 = vmatpush1.msra.mxu0 0.0
    %652 = vmatprep.subr.mxu0 0.0
    %653 = vmatpush1.msra.mxu0 0.0
    %654 = vmatprep.subr.mxu0 0.0
    %655 = vmatpush1.msra.mxu0 0.0
    %656 = vmatprep.subr.mxu0 0.0
    %657 = vmatpush1.msra.mxu0 0.0
    %658 = vmatprep.subr.mxu0 0.0
    %659 = vmatpush1.msra.mxu0 0.0
    %660 = vmatprep.subr.mxu0 0.0
    %661 = vmatpush1.msra.mxu0 0.0
    %662 = vmatprep.subr.mxu0 0.0
    %663 = vmatpush1.msra.mxu0 0.0
    %664 = vmatprep.subr.mxu0 0.0
    %665 = vmatpush1.msra.mxu0 0.0
    %666 = vmatprep.subr.mxu0 0.0
    %667 = vmatpush1.msra.mxu0 0.0
    %668 = vmatprep.subr.mxu0 0.0
    %669 = vmatpush1.msra.mxu0 0.0
    %670 = vmatprep.subr.mxu0 0.0
    %671 = vmatpush1.msra.mxu0 0.0
    %672 = vmatprep.subr.mxu0 0.0
    %673 = vmatpush1.msra.mxu0 0.0
    %674 = vmatprep.mubr.f32.mxu0 0.0
    %675 = vmatmul.mubr.f32.gmra.mrb[0].mxu0 %v609
    %v676 = vpop.f32.mrb[0].mxu0
    %v677 = vadd.f32 %v453, %v676
    %v678 = vpop.f32.mrb[0].mxu0
    %679 = vdwg.mxu0
    %v680 = vmax.f32 %v677, 0.0
    %vm681 = vcmp.ne.f32.partialorder %v677, %v677
    %v682 = vadd.f32 %v677, 0.0
    %v683 = vand.u32 2147483647, %v677
    %v684 = vsub.f32 0.0, %v683
    %v685 = vmul.f32 %v684, 1.442695
    %v686 = vpow.pop %v685
    %v687 = vadd.f32 %v686, 1.0
    %v688 = vlog2.pop %v687
    %v689 = vmul.f32 %v688, 0.6931472
    %v690 = vmul.f32 -0.5, %v686
    %v691 = vadd.f32 %v690, 1.0
    %v692 = vmul.f32 %v691, %v686
    %v693 = vand.u32 2147483647, %v686
    %vm694 = vcmp.lt.f32.partialorder %v693, 0.0004427343
    %v695 = vsel %vm694, %v692, %v689
    %v696 = vadd.f32 %v680, %v695
    %v697 = vsel %vm681, %v682, %v696
    %698 = vmatprep.subr.mxu0 0.0
    %699 = vmatpush1.msra.mxu0 %v106
    %700 = vmatprep.subr.mxu0 0.0
    %701 = vmatpush1.msra.mxu0 %v107
    %702 = vmatprep.subr.mxu0 0.0
    %703 = vmatpush1.msra.mxu0 %v108
    %704 = vmatprep.subr.mxu0 0.0
    %705 = vmatpush1.msra.mxu0 %v109
    %706 = vmatprep.subr.mxu0 0.0
    %707 = vmatpush1.msra.mxu0 %v110
    %708 = vmatprep.subr.mxu0 0.0
    %709 = vmatpush1.msra.mxu0 %v111
    %710 = vmatprep.subr.mxu0 0.0
    %711 = vmatpush1.msra.mxu0 %v112
    %712 = vmatprep.subr.mxu0 0.0
    %713 = vmatpush1.msra.mxu0 %v113
    %714 = vmatprep.subr.mxu0 0.0
    %715 = vmatpush1.msra.mxu0 %v114
    %716 = vmatprep.subr.mxu0 0.0
    %717 = vmatpush1.msra.mxu0 %v115
    %718 = vmatprep.subr.mxu0 0.0
    %719 = vmatpush1.msra.mxu0 %v116
    %720 = vmatprep.subr.mxu0 0.0
    %721 = vmatpush1.msra.mxu0 %v117
    %722 = vmatprep.subr.mxu0 0.0
    %723 = vmatpush1.msra.mxu0 %v118
    %724 = vmatprep.subr.mxu0 0.0
    %725 = vmatpush1.msra.mxu0 %v119
    %726 = vmatprep.subr.mxu0 0.0
    %727 = vmatpush1.msra.mxu0 %v120
    %728 = vmatprep.subr.mxu0 0.0
    %729 = vmatpush1.msra.mxu0 %v121
    %730 = vmatprep.subr.mxu0 0.0
    %731 = vmatpush1.msra.mxu0 0.0
    %732 = vmatprep.subr.mxu0 0.0
    %733 = vmatpush1.msra.mxu0 0.0
    %734 = vmatprep.subr.mxu0 0.0
    %735 = vmatpush1.msra.mxu0 0.0
    %736 = vmatprep.subr.mxu0 0.0
    %737 = vmatpush1.msra.mxu0 0.0
    %738 = vmatprep.subr.mxu0 0.0
    %739 = vmatpush1.msra.mxu0 0.0
    %740 = vmatprep.subr.mxu0 0.0
    %741 = vmatpush1.msra.mxu0 0.0
    %742 = vmatprep.subr.mxu0 0.0
    %743 = vmatpush1.msra.mxu0 0.0
    %744 = vmatprep.subr.mxu0 0.0
    %745 = vmatpush1.msra.mxu0 0.0
    %746 = vmatprep.subr.mxu0 0.0
    %747 = vmatpush1.msra.mxu0 0.0
    %748 = vmatprep.subr.mxu0 0.0
    %749 = vmatpush1.msra.mxu0 0.0
    %750 = vmatprep.subr.mxu0 0.0
    %751 = vmatpush1.msra.mxu0 0.0
    %752 = vmatprep.subr.mxu0 0.0
    %753 = vmatpush1.msra.mxu0 0.0
    %754 = vmatprep.subr.mxu0 0.0
    %755 = vmatpush1.msra.mxu0 0.0
    %756 = vmatprep.subr.mxu0 0.0
    %757 = vmatpush1.msra.mxu0 0.0
    %758 = vmatprep.subr.mxu0 0.0
    %759 = vmatpush1.msra.mxu0 0.0
    %760 = vmatprep.subr.mxu0 0.0
    %761 = vmatpush1.msra.mxu0 0.0
    %762 = vmatprep.mubr.f32.mxu0 0.0
    %763 = vmatmul.mubr.f32.gmra.mrb[0].mxu0 %v609
    %v764 = vpop.f32.mrb[0].mxu0
    %v765 = vadd.f32 0.0, %v764
    %v766 = vpop.f32.mrb[0].mxu0
    %767 = vdwg.mxu0
    %768 = vmatprep.subr.mxu0 0.0
    %769 = vmatpush1.msra.mxu0 %v122
    %770 = vmatprep.subr.mxu0 0.0
    %771 = vmatpush1.msra.mxu0 %v123
    %772 = vmatprep.subr.mxu0 0.0
    %773 = vmatpush1.msra.mxu0 %v124
    %774 = vmatprep.subr.mxu0 0.0
    %775 = vmatpush1.msra.mxu0 %v125
    %776 = vmatprep.subr.mxu0 0.0
    %777 = vmatpush1.msra.mxu0 %v126
    %778 = vmatprep.subr.mxu0 0.0
    %779 = vmatpush1.msra.mxu0 %v127
    %780 = vmatprep.subr.mxu0 0.0
    %781 = vmatpush1.msra.mxu0 %v128
    %782 = vmatprep.subr.mxu0 0.0
    %783 = vmatpush1.msra.mxu0 %v129
    %784 = vmatprep.subr.mxu0 0.0
    %785 = vmatpush1.msra.mxu0 %v130
    %786 = vmatprep.subr.mxu0 0.0
    %787 = vmatpush1.msra.mxu0 %v131
    %788 = vmatprep.subr.mxu0 0.0
    %789 = vmatpush1.msra.mxu0 %v132
    %790 = vmatprep.subr.mxu0 0.0
    %791 = vmatpush1.msra.mxu0 %v133
    %792 = vmatprep.subr.mxu0 0.0
    %793 = vmatpush1.msra.mxu0 %v134
    %794 = vmatprep.subr.mxu0 0.0
    %795 = vmatpush1.msra.mxu0 %v135
    %796 = vmatprep.subr.mxu0 0.0
    %797 = vmatpush1.msra.mxu0 %v136
    %798 = vmatprep.subr.mxu0 0.0
    %799 = vmatpush1.msra.mxu0 %v137
    %800 = vmatprep.subr.mxu0 0.0
    %801 = vmatpush1.msra.mxu0 0.0
    %802 = vmatprep.subr.mxu0 0.0
    %803 = vmatpush1.msra.mxu0 0.0
    %804 = vmatprep.subr.mxu0 0.0
    %805 = vmatpush1.msra.mxu0 0.0
    %806 = vmatprep.subr.mxu0 0.0
    %807 = vmatpush1.msra.mxu0 0.0
    %808 = vmatprep.subr.mxu0 0.0
    %809 = vmatpush1.msra.mxu0 0.0
    %810 = vmatprep.subr.mxu0 0.0
    %811 = vmatpush1.msra.mxu0 0.0
    %812 = vmatprep.subr.mxu0 0.0
    %813 = vmatpush1.msra.mxu0 0.0
    %814 = vmatprep.subr.mxu0 0.0
    %815 = vmatpush1.msra.mxu0 0.0
    %816 = vmatprep.subr.mxu0 0.0
    %817 = vmatpush1.msra.mxu0 0.0
    %818 = vmatprep.subr.mxu0 0.0
    %819 = vmatpush1.msra.mxu0 0.0
    %820 = vmatprep.subr.mxu0 0.0
    %821 = vmatpush1.msra.mxu0 0.0
    %822 = vmatprep.subr.mxu0 0.0
    %823 = vmatpush1.msra.mxu0 0.0
    %824 = vmatprep.subr.mxu0 0.0
    %825 = vmatpush1.msra.mxu0 0.0
    %826 = vmatprep.subr.mxu0 0.0
    %827 = vmatpush1.msra.mxu0 0.0
    %828 = vmatprep.subr.mxu0 0.0
    %829 = vmatpush1.msra.mxu0 0.0
    %830 = vmatprep.subr.mxu0 0.0
    %831 = vmatpush1.msra.mxu0 0.0
    %832 = vmatprep.mubr.f32.mxu0 0.0
    %833 = vmatmul.mubr.f32.gmra.mrb[0].mxu0 %v609
    %v834 = vpop.f32.mrb[0].mxu0
    %v835 = vadd.f32 0.0, %v834
    %v836 = vpop.f32.mrb[0].mxu0
    %837 = vdwg.mxu0
    %v838 = vmul.f32 %v765, %v835
    %vm839 = vcmask 130048
    %v840 = vsel %vm839, %v838, 0.0
    %841 = vadd.xlane.f32.xlu0 %v840
    %v842 = vpop.xlane.xlu0 %841
    %v843 = vmul.f32 %v697, %v842
    %v844 = vadd.f32 %v843, %v454
    %v845 = vmul.f32 %v844, %v609
    %v846 = vxor.u32 %v598, 2147483648
    %v847 = vmul.f32 %v846, 1.442695
    %v848 = vpow.pop %v847
    %v849 = vadd.f32 %v848, 1.0
    %v850 = vrcp.pop %v849
    %v851 = vmul.f32 1.0, %v850
    %v852 = vmul.f32 %v598, %v851
    %v853 = vmul.f32 %v845, %v852
    %854 = vmatprep.subr.mxu0 0.0
    %855 = vmatpush1.msra.mxu0 %v138
    %856 = vmatprep.subr.mxu0 0.0
    %857 = vmatpush1.msra.mxu0 %v139
    %858 = vmatprep.subr.mxu0 0.0
    %859 = vmatpush1.msra.mxu0 %v140
    %860 = vmatprep.subr.mxu0 0.0
    %861 = vmatpush1.msra.mxu0 %v141
    %862 = vmatprep.subr.mxu0 0.0
    %863 = vmatpush1.msra.mxu0 %v142
    %864 = vmatprep.subr.mxu0 0.0
    %865 = vmatpush1.msra.mxu0 %v143
    %866 = vmatprep.subr.mxu0 0.0
    %867 = vmatpush1.msra.mxu0 %v144
    %868 = vmatprep.subr.mxu0 0.0
    %869 = vmatpush1.msra.mxu0 %v145
    %870 = vmatprep.subr.mxu0 0.0
    %871 = vmatpush1.msra.mxu0 %v146
    %872 = vmatprep.subr.mxu0 0.0
    %873 = vmatpush1.msra.mxu0 %v147
    %874 = vmatprep.subr.mxu0 0.0
    %875 = vmatpush1.msra.mxu0 %v148
    %876 = vmatprep.subr.mxu0 0.0
    %877 = vmatpush1.msra.mxu0 %v149
    %878 = vmatprep.subr.mxu0 0.0
    %879 = vmatpush1.msra.mxu0 %v150
    %880 = vmatprep.subr.mxu0 0.0
    %881 = vmatpush1.msra.mxu0 %v151
    %882 = vmatprep.subr.mxu0 0.0
    %883 = vmatpush1.msra.mxu0 %v152
    %884 = vmatprep.subr.mxu0 0.0
    %885 = vmatpush1.msra.mxu0 %v153
    %886 = vmatprep.subr.mxu0 0.0
    %887 = vmatpush1.msra.mxu0 0.0
    %888 = vmatprep.subr.mxu0 0.0
    %889 = vmatpush1.msra.mxu0 0.0
    %890 = vmatprep.subr.mxu0 0.0
    %891 = vmatpush1.msra.mxu0 0.0
    %892 = vmatprep.subr.mxu0 0.0
    %893 = vmatpush1.msra.mxu0 0.0
    %894 = vmatprep.subr.mxu0 0.0
    %895 = vmatpush1.msra.mxu0 0.0
    %896 = vmatprep.subr.mxu0 0.0
    %897 = vmatpush1.msra.mxu0 0.0
    %898 = vmatprep.subr.mxu0 0.0
    %899 = vmatpush1.msra.mxu0 0.0
    %900 = vmatprep.subr.mxu0 0.0
    %901 = vmatpush1.msra.mxu0 0.0
    %902 = vmatprep.subr.mxu0 0.0
    %903 = vmatpush1.msra.mxu0 0.0
    %904 = vmatprep.subr.mxu0 0.0
    %905 = vmatpush1.msra.mxu0 0.0
    %906 = vmatprep.subr.mxu0 0.0
    %907 = vmatpush1.msra.mxu0 0.0
    %908 = vmatprep.subr.mxu0 0.0
    %909 = vmatpush1.msra.mxu0 0.0
    %910 = vmatprep.subr.mxu0 0.0
    %911 = vmatpush1.msra.mxu0 0.0
    %912 = vmatprep.subr.mxu0 0.0
    %913 = vmatpush1.msra.mxu0 0.0
    %914 = vmatprep.subr.mxu0 0.0
    %915 = vmatpush1.msra.mxu0 0.0
    %916 = vmatprep.subr.mxu0 0.0
    %917 = vmatpush1.msra.mxu0 0.0
    %918 = vmatprep.mubr.f32.mxu0 0.0
    %919 = vmatmul.mubr.f32.gmra.mrb[0].mxu0 %v853
    %v920 = vpop.f32.mrb[0].mxu0
    %v921 = vadd.f32 %v450, %v920
    %v922 = vpop.f32.mrb[0].mxu0
    %923 = vdwg.mxu0
    %v924 = vsel %vm457, %v921, 0.0
    %925 = vadd.xlane.f32.xlu0 %v924
    %v926 = vpop.xlane.xlu0 %925
    %v927 = vrcp.pop 64.0
    %v928 = vmul.f32 %v926, %v927
    %v929 = vsub.f32 %v921, %v928
    %v930 = vmul.f32 %v929, %v929
    %v931 = vsel %vm457, %v930, 0.0
    %932 = vadd.xlane.f32.xlu0 %v931
    %v933 = vpop.xlane.xlu0 %932
    %v934 = vmul.f32 %v933, %v927
    %v935 = vadd.f32 %v934, 1e-05
    %v936 = vrsqrt.pop %v935
    %v937 = vmul.f32 %v929, %v936
    %v938 = vmul.f32 %v937, %v455
    %v939 = vadd.f32 %v938, %v456
    %v940 = vld [vmem:[%s18 + $0x14] ss:$0 sm:$0xff]
    %v941 = vld [vmem:[%s18 + $0x15] ss:$0 sm:$0xff]
    %v942 = vld [vmem:[%s18 + $0x16] ss:$0 sm:$0xff]
    %v943 = vld [vmem:[%s18 + $0x17] ss:$0 sm:$0xff]
    %v944 = vld [vmem:[%s18 + $0x20] ss:$0 sm:$0xff]
    %v945 = vld [vmem:[%s18 + $0x21] ss:$0 sm:$0xff]
    %v947 = vsel %vm457, %v939, 0
    %949 = vmatprep.subr.mxu0 0.0
    %950 = vmatpush1.msra.mxu0 %v154
    %951 = vmatprep.subr.mxu0 0.0
    %952 = vmatpush1.msra.mxu0 %v155
    %953 = vmatprep.subr.mxu0 0.0
    %954 = vmatpush1.msra.mxu0 %v156
    %955 = vmatprep.subr.mxu0 0.0
    %956 = vmatpush1.msra.mxu0 %v157
    %957 = vmatprep.subr.mxu0 0.0
    %958 = vmatpush1.msra.mxu0 %v158
    %959 = vmatprep.subr.mxu0 0.0
    %960 = vmatpush1.msra.mxu0 %v159
    %961 = vmatprep.subr.mxu0 0.0
    %962 = vmatpush1.msra.mxu0 %v160
    %963 = vmatprep.subr.mxu0 0.0
    %964 = vmatpush1.msra.mxu0 %v161
    %965 = vmatprep.subr.mxu0 0.0
    %966 = vmatpush1.msra.mxu0 0.0
    %967 = vmatprep.subr.mxu0 0.0
    %968 = vmatpush1.msra.mxu0 0.0
    %969 = vmatprep.subr.mxu0 0.0
    %970 = vmatpush1.msra.mxu0 0.0
    %971 = vmatprep.subr.mxu0 0.0
    %972 = vmatpush1.msra.mxu0 0.0
    %973 = vmatprep.subr.mxu0 0.0
    %974 = vmatpush1.msra.mxu0 0.0
    %975 = vmatprep.subr.mxu0 0.0
    %976 = vmatpush1.msra.mxu0 0.0
    %977 = vmatprep.subr.mxu0 0.0
    %978 = vmatpush1.msra.mxu0 0.0
    %979 = vmatprep.subr.mxu0 0.0
    %980 = vmatpush1.msra.mxu0 0.0
    %981 = vmatprep.subr.mxu0 0.0
    %982 = vmatpush1.msra.mxu0 0.0
    %983 = vmatprep.subr.mxu0 0.0
    %984 = vmatpush1.msra.mxu0 0.0
    %985 = vmatprep.subr.mxu0 0.0
    %986 = vmatpush1.msra.mxu0 0.0
    %987 = vmatprep.subr.mxu0 0.0
    %988 = vmatpush1.msra.mxu0 0.0
    %989 = vmatprep.subr.mxu0 0.0
    %990 = vmatpush1.msra.mxu0 0.0
    %991 = vmatprep.subr.mxu0 0.0
    %992 = vmatpush1.msra.mxu0 0.0
    %993 = vmatprep.subr.mxu0 0.0
    %994 = vmatpush1.msra.mxu0 0.0
    %995 = vmatprep.subr.mxu0 0.0
    %996 = vmatpush1.msra.mxu0 0.0
    %997 = vmatprep.subr.mxu0 0.0
    %998 = vmatpush1.msra.mxu0 0.0
    %999 = vmatprep.subr.mxu0 0.0
    %1000 = vmatpush1.msra.mxu0 0.0
    %1001 = vmatprep.subr.mxu0 0.0
    %1002 = vmatpush1.msra.mxu0 0.0
    %1003 = vmatprep.subr.mxu0 0.0
    %1004 = vmatpush1.msra.mxu0 0.0
    %1005 = vmatprep.subr.mxu0 0.0
    %1006 = vmatpush1.msra.mxu0 0.0
    %1007 = vmatprep.subr.mxu0 0.0
    %1008 = vmatpush1.msra.mxu0 0.0
    %1009 = vmatprep.subr.mxu0 0.0
    %1010 = vmatpush1.msra.mxu0 0.0
    %1011 = vmatprep.subr.mxu0 0.0
    %1012 = vmatpush1.msra.mxu0 0.0
    %1013 = vmatprep.mubr.f32.mxu0 0.0
    %1014 = vmatmul.mubr.f32.gmra.mrb[0].mxu0 %v947
    %v1015 = vpop.f32.mrb[0].mxu0
    %v1016 = vadd.f32 0.0, %v1015
    %v1017 = vpop.f32.mrb[0].mxu0
    %1018 = vdwg.mxu0
    %1019 = vmatprep.subr.mxu0 0.0
    %1020 = vmatpush1.msra.mxu0 %v162
    %1021 = vmatprep.subr.mxu0 0.0
    %1022 = vmatpush1.msra.mxu0 %v163
    %1023 = vmatprep.subr.mxu0 0.0
    %1024 = vmatpush1.msra.mxu0 %v164
    %1025 = vmatprep.subr.mxu0 0.0
    %1026 = vmatpush1.msra.mxu0 %v165
    %1027 = vmatprep.subr.mxu0 0.0
    %1028 = vmatpush1.msra.mxu0 %v166
    %1029 = vmatprep.subr.mxu0 0.0
    %1030 = vmatpush1.msra.mxu0 %v167
    %1031 = vmatprep.subr.mxu0 0.0
    %1032 = vmatpush1.msra.mxu0 %v168
    %1033 = vmatprep.subr.mxu0 0.0
    %1034 = vmatpush1.msra.mxu0 %v169
    %1035 = vmatprep.subr.mxu0 0.0
    %1036 = vmatpush1.msra.mxu0 0.0
    %1037 = vmatprep.subr.mxu0 0.0
    %1038 = vmatpush1.msra.mxu0 0.0
    %1039 = vmatprep.subr.mxu0 0.0
    %1040 = vmatpush1.msra.mxu0 0.0
    %1041 = vmatprep.subr.mxu0 0.0
    %1042 = vmatpush1.msra.mxu0 0.0
    %1043 = vmatprep.subr.mxu0 0.0
    %1044 = vmatpush1.msra.mxu0 0.0
    %1045 = vmatprep.subr.mxu0 0.0
    %1046 = vmatpush1.msra.mxu0 0.0
    %1047 = vmatprep.subr.mxu0 0.0
    %1048 = vmatpush1.msra.mxu0 0.0
    %1049 = vmatprep.subr.mxu0 0.0
    %1050 = vmatpush1.msra.mxu0 0.0
    %1051 = vmatprep.subr.mxu0 0.0
    %1052 = vmatpush1.msra.mxu0 0.0
    %1053 = vmatprep.subr.mxu0 0.0
    %1054 = vmatpush1.msra.mxu0 0.0
    %1055 = vmatprep.subr.mxu0 0.0
    %1056 = vmatpush1.msra.mxu0 0.0
    %1057 = vmatprep.subr.mxu0 0.0
    %1058 = vmatpush1.msra.mxu0 0.0
    %1059 = vmatprep.subr.mxu0 0.0
    %1060 = vmatpush1.msra.mxu0 0.0
    %1061 = vmatprep.subr.mxu0 0.0
    %1062 = vmatpush1.msra.mxu0 0.0
    %1063 = vmatprep.subr.mxu0 0.0
    %1064 = vmatpush1.msra.mxu0 0.0
    %1065 = vmatprep.subr.mxu0 0.0
    %1066 = vmatpush1.msra.mxu0 0.0
    %1067 = vmatprep.subr.mxu0 0.0
    %1068 = vmatpush1.msra.mxu0 0.0
    %1069 = vmatprep.subr.mxu0 0.0
    %1070 = vmatpush1.msra.mxu0 0.0
    %1071 = vmatprep.subr.mxu0 0.0
    %1072 = vmatpush1.msra.mxu0 0.0
    %1073 = vmatprep.subr.mxu0 0.0
    %1074 = vmatpush1.msra.mxu0 0.0
    %1075 = vmatprep.subr.mxu0 0.0
    %1076 = vmatpush1.msra.mxu0 0.0
    %1077 = vmatprep.subr.mxu0 0.0
    %1078 = vmatpush1.msra.mxu0 0.0
    %1079 = vmatprep.subr.mxu0 0.0
    %1080 = vmatpush1.msra.mxu0 0.0
    %1081 = vmatprep.subr.mxu0 0.0
    %1082 = vmatpush1.msra.mxu0 0.0
    %1083 = vmatprep.mubr.f32.mxu0 0.0
    %1084 = vmatmul.mubr.f32.gmra.mrb[0].mxu0 %v947
    %v1085 = vpop.f32.mrb[0].mxu0
    %v1086 = vadd.f32 0.0, %v1085
    %v1087 = vpop.f32.mrb[0].mxu0
    %1088 = vdwg.mxu0
    %v1089 = vmul.f32 %v1016, %v940
    %v1090 = vadd.f32 %v1089, %v941
    %v1091 = vxor.u32 %v1090, 2147483648
    %v1092 = vmul.f32 %v1091, 1.442695
    %v1093 = vpow.pop %v1092
    %v1094 = vadd.f32 %v1093, 1.0
    %v1095 = vrcp.pop %v1094
    %v1096 = vmul.f32 1.0, %v1095
    %v1097 = vmul.f32 %v1090, %v1096
    %1098 = vmatprep.subr.mxu0 0.0
    %1099 = vmatpush1.msra.mxu0 %v170
    %1100 = vmatprep.subr.mxu0 0.0
    %1101 = vmatpush1.msra.mxu0 %v171
    %1102 = vmatprep.subr.mxu0 0.0
    %1103 = vmatpush1.msra.mxu0 %v172
    %1104 = vmatprep.subr.mxu0 0.0
    %1105 = vmatpush1.msra.mxu0 %v173
    %1106 = vmatprep.subr.mxu0 0.0
    %1107 = vmatpush1.msra.mxu0 %v174
    %1108 = vmatprep.subr.mxu0 0.0
    %1109 = vmatpush1.msra.mxu0 %v175
    %1110 = vmatprep.subr.mxu0 0.0
    %1111 = vmatpush1.msra.mxu0 %v176
    %1112 = vmatprep.subr.mxu0 0.0
    %1113 = vmatpush1.msra.mxu0 %v177
    %1114 = vmatprep.subr.mxu0 0.0
    %1115 = vmatpush1.msra.mxu0 %v178
    %1116 = vmatprep.subr.mxu0 0.0
    %1117 = vmatpush1.msra.mxu0 %v179
    %1118 = vmatprep.subr.mxu0 0.0
    %1119 = vmatpush1.msra.mxu0 %v180
    %1120 = vmatprep.subr.mxu0 0.0
    %1121 = vmatpush1.msra.mxu0 %v181
    %1122 = vmatprep.subr.mxu0 0.0
    %1123 = vmatpush1.msra.mxu0 %v182
    %1124 = vmatprep.subr.mxu0 0.0
    %1125 = vmatpush1.msra.mxu0 %v183
    %1126 = vmatprep.subr.mxu0 0.0
    %1127 = vmatpush1.msra.mxu0 %v184
    %1128 = vmatprep.subr.mxu0 0.0
    %1129 = vmatpush1.msra.mxu0 %v185
    %1130 = vmatprep.subr.mxu0 0.0
    %1131 = vmatpush1.msra.mxu0 0.0
    %1132 = vmatprep.subr.mxu0 0.0
    %1133 = vmatpush1.msra.mxu0 0.0
    %1134 = vmatprep.subr.mxu0 0.0
    %1135 = vmatpush1.msra.mxu0 0.0
    %1136 = vmatprep.subr.mxu0 0.0
    %1137 = vmatpush1.msra.mxu0 0.0
    %1138 = vmatprep.subr.mxu0 0.0
    %1139 = vmatpush1.msra.mxu0 0.0
    %1140 = vmatprep.subr.mxu0 0.0
    %1141 = vmatpush1.msra.mxu0 0.0
    %1142 = vmatprep.subr.mxu0 0.0
    %1143 = vmatpush1.msra.mxu0 0.0
    %1144 = vmatprep.subr.mxu0 0.0
    %1145 = vmatpush1.msra.mxu0 0.0
    %1146 = vmatprep.subr.mxu0 0.0
    %1147 = vmatpush1.msra.mxu0 0.0
    %1148 = vmatprep.subr.mxu0 0.0
    %1149 = vmatpush1.msra.mxu0 0.0
    %1150 = vmatprep.subr.mxu0 0.0
    %1151 = vmatpush1.msra.mxu0 0.0
    %1152 = vmatprep.subr.mxu0 0.0
    %1153 = vmatpush1.msra.mxu0 0.0
    %1154 = vmatprep.subr.mxu0 0.0
    %1155 = vmatpush1.msra.mxu0 0.0
    %1156 = vmatprep.subr.mxu0 0.0
    %1157 = vmatpush1.msra.mxu0 0.0
    %1158 = vmatprep.subr.mxu0 0.0
    %1159 = vmatpush1.msra.mxu0 0.0
    %1160 = vmatprep.subr.mxu0 0.0
    %1161 = vmatpush1.msra.mxu0 0.0
    %1162 = vmatprep.mubr.f32.mxu0 0.0
    %1163 = vmatmul.mubr.f32.gmra.mrb[0].mxu0 %v1097
    %v1164 = vpop.f32.mrb[0].mxu0
    %v1165 = vadd.f32 %v942, %v1164
    %v1166 = vpop.f32.mrb[0].mxu0
    %1167 = vdwg.mxu0
    %v1168 = vmax.f32 %v1165, 0.0
    %vm1169 = vcmp.ne.f32.partialorder %v1165, %v1165
    %v1170 = vadd.f32 %v1165, 0.0
    %v1171 = vand.u32 2147483647, %v1165
    %v1172 = vsub.f32 0.0, %v1171
    %v1173 = vmul.f32 %v1172, 1.442695
    %v1174 = vpow.pop %v1173
    %v1175 = vadd.f32 %v1174, 1.0
    %v1176 = vlog2.pop %v1175
    %v1177 = vmul.f32 %v1176, 0.6931472
    %v1178 = vmul.f32 -0.5, %v1174
    %v1179 = vadd.f32 %v1178, 1.0
    %v1180 = vmul.f32 %v1179, %v1174
    %v1181 = vand.u32 2147483647, %v1174
    %vm1182 = vcmp.lt.f32.partialorder %v1181, 0.0004427343
    %v1183 = vsel %vm1182, %v1180, %v1177
    %v1184 = vadd.f32 %v1168, %v1183
    %v1185 = vsel %vm1169, %v1170, %v1184
    %1186 = vmatprep.subr.mxu0 0.0
    %1187 = vmatpush1.msra.mxu0 %v186
    %1188 = vmatprep.subr.mxu0 0.0
    %1189 = vmatpush1.msra.mxu0 %v187
    %1190 = vmatprep.subr.mxu0 0.0
    %1191 = vmatpush1.msra.mxu0 %v188
    %1192 = vmatprep.subr.mxu0 0.0
    %1193 = vmatpush1.msra.mxu0 %v189
    %1194 = vmatprep.subr.mxu0 0.0
    %1195 = vmatpush1.msra.mxu0 %v190
    %1196 = vmatprep.subr.mxu0 0.0
    %1197 = vmatpush1.msra.mxu0 %v191
    %1198 = vmatprep.subr.mxu0 0.0
    %1199 = vmatpush1.msra.mxu0 %v192
    %1200 = vmatprep.subr.mxu0 0.0
    %1201 = vmatpush1.msra.mxu0 %v193
    %1202 = vmatprep.subr.mxu0 0.0
    %1203 = vmatpush1.msra.mxu0 %v194
    %1204 = vmatprep.subr.mxu0 0.0
    %1205 = vmatpush1.msra.mxu0 %v195
    %1206 = vmatprep.subr.mxu0 0.0
    %1207 = vmatpush1.msra.mxu0 %v196
    %1208 = vmatprep.subr.mxu0 0.0
    %1209 = vmatpush1.msra.mxu0 %v197
    %1210 = vmatprep.subr.mxu0 0.0
    %1211 = vmatpush1.msra.mxu0 %v198
    %1212 = vmatprep.subr.mxu0 0.0
    %1213 = vmatpush1.msra.mxu0 %v199
    %1214 = vmatprep.subr.mxu0 0.0
    %1215 = vmatpush1.msra.mxu0 %v200
    %1216 = vmatprep.subr.mxu0 0.0
    %1217 = vmatpush1.msra.mxu0 %v201
    %1218 = vmatprep.subr.mxu0 0.0
    %1219 = vmatpush1.msra.mxu0 0.0
    %1220 = vmatprep.subr.mxu0 0.0
    %1221 = vmatpush1.msra.mxu0 0.0
    %1222 = vmatprep.subr.mxu0 0.0
    %1223 = vmatpush1.msra.mxu0 0.0
    %1224 = vmatprep.subr.mxu0 0.0
    %1225 = vmatpush1.msra.mxu0 0.0
    %1226 = vmatprep.subr.mxu0 0.0
    %1227 = vmatpush1.msra.mxu0 0.0
    %1228 = vmatprep.subr.mxu0 0.0
    %1229 = vmatpush1.msra.mxu0 0.0
    %1230 = vmatprep.subr.mxu0 0.0
    %1231 = vmatpush1.msra.mxu0 0.0
    %1232 = vmatprep.subr.mxu0 0.0
    %1233 = vmatpush1.msra.mxu0 0.0
    %1234 = vmatprep.subr.mxu0 0.0
    %1235 = vmatpush1.msra.mxu0 0.0
    %1236 = vmatprep.subr.mxu0 0.0
    %1237 = vmatpush1.msra.mxu0 0.0
    %1238 = vmatprep.subr.mxu0 0.0
    %1239 = vmatpush1.msra.mxu0 0.0
    %1240 = vmatprep.subr.mxu0 0.0
    %1241 = vmatpush1.msra.mxu0 0.0
    %1242 = vmatprep.subr.mxu0 0.0
    %1243 = vmatpush1.msra.mxu0 0.0
    %1244 = vmatprep.subr.mxu0 0.0
    %1245 = vmatpush1.msra.mxu0 0.0
    %1246 = vmatprep.subr.mxu0 0.0
    %1247 = vmatpush1.msra.mxu0 0.0
    %1248 = vmatprep.subr.mxu0 0.0
    %1249 = vmatpush1.msra.mxu0 0.0
    %1250 = vmatprep.mubr.f32.mxu0 0.0
    %1251 = vmatmul.mubr.f32.gmra.mrb[0].mxu0 %v1097
    %v1252 = vpop.f32.mrb[0].mxu0
    %v1253 = vadd.f32 0.0, %v1252
    %v1254 = vpop.f32.mrb[0].mxu0
    %1255 = vdwg.mxu0
    %1256 = vmatprep.subr.mxu0 0.0
    %1257 = vmatpush1.msra.mxu0 %v202
    %1258 = vmatprep.subr.mxu0 0.0
    %1259 = vmatpush1.msra.mxu0 %v203
    %1260 = vmatprep.subr.mxu0 0.0
    %1261 = vmatpush1.msra.mxu0 %v204
    %1262 = vmatprep.subr.mxu0 0.0
    %1263 = vmatpush1.msra.mxu0 %v205
    %1264 = vmatprep.subr.mxu0 0.0
    %1265 = vmatpush1.msra.mxu0 %v206
    %1266 = vmatprep.subr.mxu0 0.0
    %1267 = vmatpush1.msra.mxu0 %v207
    %1268 = vmatprep.subr.mxu0 0.0
    %1269 = vmatpush1.msra.mxu0 %v208
    %1270 = vmatprep.subr.mxu0 0.0
    %1271 = vmatpush1.msra.mxu0 %v209
    %1272 = vmatprep.subr.mxu0 0.0
    %1273 = vmatpush1.msra.mxu0 %v210
    %1274 = vmatprep.subr.mxu0 0.0
    %1275 = vmatpush1.msra.mxu0 %v211
    %1276 = vmatprep.subr.mxu0 0.0
    %1277 = vmatpush1.msra.mxu0 %v212
    %1278 = vmatprep.subr.mxu0 0.0
    %1279 = vmatpush1.msra.mxu0 %v213
    %1280 = vmatprep.subr.mxu0 0.0
    %1281 = vmatpush1.msra.mxu0 %v214
    %1282 = vmatprep.subr.mxu0 0.0
    %1283 = vmatpush1.msra.mxu0 %v215
    %1284 = vmatprep.subr.mxu0 0.0
    %1285 = vmatpush1.msra.mxu0 %v216
    %1286 = vmatprep.subr.mxu0 0.0
    %1287 = vmatpush1.msra.mxu0 %v217
    %1288 = vmatprep.subr.mxu0 0.0
    %1289 = vmatpush1.msra.mxu0 0.0
    %1290 = vmatprep.subr.mxu0 0.0
    %1291 = vmatpush1.msra.mxu0 0.0
    %1292 = vmatprep.subr.mxu0 0.0
    %1293 = vmatpush1.msra.mxu0 0.0
    %1294 = vmatprep.subr.mxu0 0.0
    %1295 = vmatpush1.msra.mxu0 0.0
    %1296 = vmatprep.subr.mxu0 0.0
    %1297 = vmatpush1.msra.mxu0 0.0
    %1298 = vmatprep.subr.mxu0 0.0
    %1299 = vmatpush1.msra.mxu0 0.0
    %1300 = vmatprep.subr.mxu0 0.0
    %1301 = vmatpush1.msra.mxu0 0.0
    %1302 = vmatprep.subr.mxu0 0.0
    %1303 = vmatpush1.msra.mxu0 0.0
    %1304 = vmatprep.subr.mxu0 0.0
    %1305 = vmatpush1.msra.mxu0 0.0
    %1306 = vmatprep.subr.mxu0 0.0
    %1307 = vmatpush1.msra.mxu0 0.0
    %1308 = vmatprep.subr.mxu0 0.0
    %1309 = vmatpush1.msra.mxu0 0.0
    %1310 = vmatprep.subr.mxu0 0.0
    %1311 = vmatpush1.msra.mxu0 0.0
    %1312 = vmatprep.subr.mxu0 0.0
    %1313 = vmatpush1.msra.mxu0 0.0
    %1314 = vmatprep.subr.mxu0 0.0
    %1315 = vmatpush1.msra.mxu0 0.0
    %1316 = vmatprep.subr.mxu0 0.0
    %1317 = vmatpush1.msra.mxu0 0.0
    %1318 = vmatprep.subr.mxu0 0.0
    %1319 = vmatpush1.msra.mxu0 0.0
    %1320 = vmatprep.mubr.f32.mxu0 0.0
    %1321 = vmatmul.mubr.f32.gmra.mrb[0].mxu0 %v1097
    %v1322 = vpop.f32.mrb[0].mxu0
    %v1323 = vadd.f32 0.0, %v1322
    %v1324 = vpop.f32.mrb[0].mxu0
    %1325 = vdwg.mxu0
    %v1326 = vmul.f32 %v1253, %v1323
    %v1327 = vsel %vm839, %v1326, 0.0
    %1328 = vadd.xlane.f32.xlu0 %v1327
    %v1329 = vpop.xlane.xlu0 %1328
    %v1330 = vmul.f32 %v1185, %v1329
    %v1331 = vadd.f32 %v1330, %v943
    %v1332 = vmul.f32 %v1331, %v1097
    %v1333 = vxor.u32 %v1086, 2147483648
    %v1334 = vmul.f32 %v1333, 1.442695
    %v1335 = vpow.pop %v1334
    %v1336 = vadd.f32 %v1335, 1.0
    %v1337 = vrcp.pop %v1336
    %v1338 = vmul.f32 1.0, %v1337
    %v1339 = vmul.f32 %v1086, %v1338
    %v1340 = vmul.f32 %v1332, %v1339
    %1341 = vmatprep.subr.mxu0 0.0
    %1342 = vmatpush1.msra.mxu0 %v218
    %1343 = vmatprep.subr.mxu0 0.0
    %1344 = vmatpush1.msra.mxu0 %v219
    %1345 = vmatprep.subr.mxu0 0.0
    %1346 = vmatpush1.msra.mxu0 %v220
    %1347 = vmatprep.subr.mxu0 0.0
    %1348 = vmatpush1.msra.mxu0 %v221
    %1349 = vmatprep.subr.mxu0 0.0
    %1350 = vmatpush1.msra.mxu0 %v222
    %1351 = vmatprep.subr.mxu0 0.0
    %1352 = vmatpush1.msra.mxu0 %v223
    %1353 = vmatprep.subr.mxu0 0.0
    %1354 = vmatpush1.msra.mxu0 %v224
    %1355 = vmatprep.subr.mxu0 0.0
    %1356 = vmatpush1.msra.mxu0 %v225
    %1357 = vmatprep.subr.mxu0 0.0
    %1358 = vmatpush1.msra.mxu0 %v226
    %1359 = vmatprep.subr.mxu0 0.0
    %1360 = vmatpush1.msra.mxu0 %v227
    %1361 = vmatprep.subr.mxu0 0.0
    %1362 = vmatpush1.msra.mxu0 %v228
    %1363 = vmatprep.subr.mxu0 0.0
    %1364 = vmatpush1.msra.mxu0 %v229
    %1365 = vmatprep.subr.mxu0 0.0
    %1366 = vmatpush1.msra.mxu0 %v230
    %1367 = vmatprep.subr.mxu0 0.0
    %1368 = vmatpush1.msra.mxu0 %v231
    %1369 = vmatprep.subr.mxu0 0.0
    %1370 = vmatpush1.msra.mxu0 %v232
    %1371 = vmatprep.subr.mxu0 0.0
    %1372 = vmatpush1.msra.mxu0 %v233
    %1373 = vmatprep.subr.mxu0 0.0
    %1374 = vmatpush1.msra.mxu0 0.0
    %1375 = vmatprep.subr.mxu0 0.0
    %1376 = vmatpush1.msra.mxu0 0.0
    %1377 = vmatprep.subr.mxu0 0.0
    %1378 = vmatpush1.msra.mxu0 0.0
    %1379 = vmatprep.subr.mxu0 0.0
    %1380 = vmatpush1.msra.mxu0 0.0
    %1381 = vmatprep.subr.mxu0 0.0
    %1382 = vmatpush1.msra.mxu0 0.0
    %1383 = vmatprep.subr.mxu0 0.0
    %1384 = vmatpush1.msra.mxu0 0.0
    %1385 = vmatprep.subr.mxu0 0.0
    %1386 = vmatpush1.msra.mxu0 0.0
    %1387 = vmatprep.subr.mxu0 0.0
    %1388 = vmatpush1.msra.mxu0 0.0
    %1389 = vmatprep.subr.mxu0 0.0
    %1390 = vmatpush1.msra.mxu0 0.0
    %1391 = vmatprep.subr.mxu0 0.0
    %1392 = vmatpush1.msra.mxu0 0.0
    %1393 = vmatprep.subr.mxu0 0.0
    %1394 = vmatpush1.msra.mxu0 0.0
    %1395 = vmatprep.subr.mxu0 0.0
    %1396 = vmatpush1.msra.mxu0 0.0
    %1397 = vmatprep.subr.mxu0 0.0
    %1398 = vmatpush1.msra.mxu0 0.0
    %1399 = vmatprep.subr.mxu0 0.0
    %1400 = vmatpush1.msra.mxu0 0.0
    %1401 = vmatprep.subr.mxu0 0.0
    %1402 = vmatpush1.msra.mxu0 0.0
    %1403 = vmatprep.subr.mxu0 0.0
    %1404 = vmatpush1.msra.mxu0 0.0
    %1405 = vmatprep.mubr.f32.mxu0 0.0
    %1406 = vmatmul.mubr.f32.gmra.mrb[0].mxu0 %v1340
    %v1407 = vpop.f32.mrb[0].mxu0
    %v1408 = vadd.f32 %v939, %v1407
    %v1409 = vpop.f32.mrb[0].mxu0
    %1410 = vdwg.mxu0
    %v1411 = vsel %vm457, %v1408, 0.0
    %1412 = vadd.xlane.f32.xlu0 %v1411
    %v1413 = vpop.xlane.xlu0 %1412
    %v1414 = vmul.f32 %v1413, %v927
    %v1415 = vsub.f32 %v1408, %v1414
    %v1416 = vmul.f32 %v1415, %v1415
    %v1417 = vsel %vm457, %v1416, 0.0
    %1418 = vadd.xlane.f32.xlu0 %v1417
    %v1419 = vpop.xlane.xlu0 %1418
    %v1420 = vmul.f32 %v1419, %v927
    %v1421 = vadd.f32 %v1420, 1e-05
    %v1422 = vrsqrt.pop %v1421
    %v1423 = vmul.f32 %v1415, %v1422
    %v1424 = vmul.f32 %v1423, %v944
    %v1425 = vadd.f32 %v1424, %v945
    %v1426 = vld [vmem:[%s18 + $0x22] ss:$0 sm:$0xff]
    %v1428 = vsel %vm457, %v1425, 0
    %1430 = vmatprep.subr.mxu0 0.0
    %1431 = vmatpush1.msra.mxu0 %v234
    %1432 = vmatprep.subr.mxu0 0.0
    %1433 = vmatpush1.msra.mxu0 %v235
    %1434 = vmatprep.subr.mxu0 0.0
    %1435 = vmatpush1.msra.mxu0 %v236
    %1436 = vmatprep.subr.mxu0 0.0
    %1437 = vmatpush1.msra.mxu0 %v237
    %1438 = vmatprep.subr.mxu0 0.0
    %1439 = vmatpush1.msra.mxu0 %v238
    %1440 = vmatprep.subr.mxu0 0.0
    %1441 = vmatpush1.msra.mxu0 %v239
    %1442 = vmatprep.subr.mxu0 0.0
    %1443 = vmatpush1.msra.mxu0 %v240
    %1444 = vmatprep.subr.mxu0 0.0
    %1445 = vmatpush1.msra.mxu0 %v241
    %1446 = vmatprep.subr.mxu0 0.0
    %1447 = vmatpush1.msra.mxu0 0.0
    %1448 = vmatprep.subr.mxu0 0.0
    %1449 = vmatpush1.msra.mxu0 0.0
    %1450 = vmatprep.subr.mxu0 0.0
    %1451 = vmatpush1.msra.mxu0 0.0
    %1452 = vmatprep.subr.mxu0 0.0
    %1453 = vmatpush1.msra.mxu0 0.0
    %1454 = vmatprep.subr.mxu0 0.0
    %1455 = vmatpush1.msra.mxu0 0.0
    %1456 = vmatprep.subr.mxu0 0.0
    %1457 = vmatpush1.msra.mxu0 0.0
    %1458 = vmatprep.subr.mxu0 0.0
    %1459 = vmatpush1.msra.mxu0 0.0
    %1460 = vmatprep.subr.mxu0 0.0
    %1461 = vmatpush1.msra.mxu0 0.0
    %1462 = vmatprep.subr.mxu0 0.0
    %1463 = vmatpush1.msra.mxu0 0.0
    %1464 = vmatprep.subr.mxu0 0.0
    %1465 = vmatpush1.msra.mxu0 0.0
    %1466 = vmatprep.subr.mxu0 0.0
    %1467 = vmatpush1.msra.mxu0 0.0
    %1468 = vmatprep.subr.mxu0 0.0
    %1469 = vmatpush1.msra.mxu0 0.0
    %1470 = vmatprep.subr.mxu0 0.0
    %1471 = vmatpush1.msra.mxu0 0.0
    %1472 = vmatprep.subr.mxu0 0.0
    %1473 = vmatpush1.msra.mxu0 0.0
    %1474 = vmatprep.subr.mxu0 0.0
    %1475 = vmatpush1.msra.mxu0 0.0
    %1476 = vmatprep.subr.mxu0 0.0
    %1477 = vmatpush1.msra.mxu0 0.0
    %1478 = vmatprep.subr.mxu0 0.0
    %1479 = vmatpush1.msra.mxu0 0.0
    %1480 = vmatprep.subr.mxu0 0.0
    %1481 = vmatpush1.msra.mxu0 0.0
    %1482 = vmatprep.subr.mxu0 0.0
    %1483 = vmatpush1.msra.mxu0 0.0
    %1484 = vmatprep.subr.mxu0 0.0
    %1485 = vmatpush1.msra.mxu0 0.0
    %1486 = vmatprep.subr.mxu0 0.0
    %1487 = vmatpush1.msra.mxu0 0.0
    %1488 = vmatprep.subr.mxu0 0.0
    %1489 = vmatpush1.msra.mxu0 0.0
    %1490 = vmatprep.subr.mxu0 0.0
    %1491 = vmatpush1.msra.mxu0 0.0
    %1492 = vmatprep.subr.mxu0 0.0
    %1493 = vmatpush1.msra.mxu0 0.0
    %1494 = vmatprep.mubr.f32.mxu0 0.0
    %1495 = vmatmul.mubr.f32.gmra.mrb[0].mxu0 %v1428
    %v1496 = vpop.f32.mrb[0].mxu0
    %v1497 = vadd.f32 %v1426, %v1496
    %v1498 = vpop.f32.mrb[0].mxu0
    %1499 = vdwg.mxu0
    %v1500 = vmax.f32 %v1497, 0.0
    %v1501 = vld [vmem:[%s18 + $0x23] ss:$0 sm:$0xff]
    %v1502 = vmul.f32 %v1500, %v1501
    %v1503 = vsel %vm261, %v1502, 0.0
    %1504 = vadd.xlane.f32.xlu0 %v1503
    %v1505 = vpop.xlane.xlu0 %1504
    %v1506 = vld [vmem:[%s18 + $0x24] ss:$0 sm:$0xff]
    %v1507 = vadd.f32 %v1505, %v1506
    %v1508 = vxor.u32 %v1507, 2147483648
    %v1509 = vmul.f32 %v1508, 1.442695
    %v1510 = vpow.pop %v1509
    %v1511 = vadd.f32 %v1510, 1.0
    %v1512 = vrcp.pop %v1511
    %v1513 = vmul.f32 1.0, %v1512
    %v1514 = vlaneseq
    %v1515 = vand.u32 %v1514, 127
    %vm1516 = vcmp.eq.s32.totalorder %v1515, 0
    %vm1517 = vcmp.eq.s32.totalorder %v1515, 1
    %v1518 = vsub.f32 1.0, %v1513
    %1520 = vset.pattern.permute.xlu0 0
    %1521 = vperm.xlu0 %1520, %v1518
    %v1522 = vpop.permute.xlu0 %1521
    %v1524 = vsel %vm1517, %v1522, 0.0
    %1526 = vset.pattern.permute.xlu0 0
    %1527 = vperm.xlu0 %1526, %v1513
    %v1528 = vpop.permute.xlu0 %1527
    %v1530 = vsel %vm1516, %v1528, %v1524
    %1531 = vst [vmem:[#allocation4] sm:$0xff] %v1530
    %s1532 = scalar_lea.vmem %s18, 37
    %v1533 = vld [vmem:[%s1532] ss:$8 sm:$0x3]
    %v1535 = vlaneseq
    %v1536 = vshrl.u32 %v1535, 7
    %v1537 = vsub.s32 0, %v1536
    %v1538 = vrot.slane %v1533, %v1537
    %v1539 = vlaneseq
    %v1540 = vshrl.u32 %v1539, 7
    %v1541 = vsub.s32 1, %v1540
    %v1542 = vrot.slane %v1533, %v1541
    %1545 = vmatprep.subr.mxu0 %v243
    %1546 = vmatpush1.msra.mxu0 %v242
    %1547 = vmatprep.subr.mxu0 %v245
    %1548 = vmatpush1.msra.mxu0 %v244
    %1549 = vmatprep.subr.mxu0 %v247
    %1550 = vmatpush1.msra.mxu0 %v246
    %1551 = vmatprep.subr.mxu0 %v249
    %1552 = vmatpush1.msra.mxu0 %v248
    %1553 = vmatprep.subr.mxu0 %v251
    %1554 = vmatpush1.msra.mxu0 %v250
    %1555 = vmatprep.subr.mxu0 %v253
    %1556 = vmatpush1.msra.mxu0 %v252
    %1557 = vmatprep.subr.mxu0 %v255
    %1558 = vmatpush1.msra.mxu0 %v254
    %1559 = vmatprep.subr.mxu0 %v257
    %1560 = vmatpush1.msra.mxu0 %v256
    %1561 = vmatprep.subr.mxu0 0.0
    %1562 = vmatpush1.msra.mxu0 0.0
    %1563 = vmatprep.subr.mxu0 0.0
    %1564 = vmatpush1.msra.mxu0 0.0
    %1565 = vmatprep.subr.mxu0 0.0
    %1566 = vmatpush1.msra.mxu0 0.0
    %1567 = vmatprep.subr.mxu0 0.0
    %1568 = vmatpush1.msra.mxu0 0.0
    %1569 = vmatprep.subr.mxu0 0.0
    %1570 = vmatpush1.msra.mxu0 0.0
    %1571 = vmatprep.subr.mxu0 0.0
    %1572 = vmatpush1.msra.mxu0 0.0
    %1573 = vmatprep.subr.mxu0 0.0
    %1574 = vmatpush1.msra.mxu0 0.0
    %1575 = vmatprep.subr.mxu0 0.0
    %1576 = vmatpush1.msra.mxu0 0.0
    %1577 = vmatprep.subr.mxu0 0.0
    %1578 = vmatpush1.msra.mxu0 0.0
    %1579 = vmatprep.subr.mxu0 0.0
    %1580 = vmatpush1.msra.mxu0 0.0
    %1581 = vmatprep.subr.mxu0 0.0
    %1582 = vmatpush1.msra.mxu0 0.0
    %1583 = vmatprep.subr.mxu0 0.0
    %1584 = vmatpush1.msra.mxu0 0.0
    %1585 = vmatprep.subr.mxu0 0.0
    %1586 = vmatpush1.msra.mxu0 0.0
    %1587 = vmatprep.subr.mxu0 0.0
    %1588 = vmatpush1.msra.mxu0 0.0
    %1589 = vmatprep.subr.mxu0 0.0
    %1590 = vmatpush1.msra.mxu0 0.0
    %1591 = vmatprep.subr.mxu0 0.0
    %1592 = vmatpush1.msra.mxu0 0.0
    %1593 = vmatprep.subr.mxu0 0.0
    %1594 = vmatpush1.msra.mxu0 0.0
    %1595 = vmatprep.subr.mxu0 0.0
    %1596 = vmatpush1.msra.mxu0 0.0
    %1597 = vmatprep.subr.mxu0 0.0
    %1598 = vmatpush1.msra.mxu0 0.0
    %1599 = vmatprep.subr.mxu0 0.0
    %1600 = vmatpush1.msra.mxu0 0.0
    %1601 = vmatprep.subr.mxu0 0.0
    %1602 = vmatpush1.msra.mxu0 0.0
    %1603 = vmatprep.subr.mxu0 0.0
    %1604 = vmatpush1.msra.mxu0 0.0
    %1605 = vmatprep.subr.mxu0 0.0
    %1606 = vmatpush1.msra.mxu0 0.0
    %1607 = vmatprep.subr.mxu0 0.0
    %1608 = vmatpush1.msra.mxu0 0.0
    %1609 = vmatprep.mubr.f32.mxu0 0.0
    %1610 = vmatmul.mubr.f32.gmra.mrb[0].mxu0 %v1428
    %v1611 = vpop.f32.mrb[0].mxu0
    %v1612 = vadd.f32 %v1538, %v1611
    %v1613 = vpop.f32.mrb[0].mxu0
    %v1614 = vadd.f32 %v1542, %v1613
    %1615 = vdwg.mxu0
    %s1616 = scalar_lea.vmem %s18, 38
    %v1617 = vld [vmem:[%s1616] ss:$8 sm:$0x3]
    %s1618 = scalar_lea.vmem %s18, 39
    %v1619 = vld [vmem:[%s1618] ss:$8 sm:$0x3]
    %v1620 = vadd.f32 %v1612, %v1614
    %1621 = vadd.xlane.f32.xlu0 %v1620
    %v1622 = vpop.xlane.xlu0 %1621
    %v1623 = vrcp.pop 256.0
    %v1624 = vmul.f32 %v1622, %v1623
    %v1625 = vsub.f32 %v1612, %v1624
    %v1626 = vsub.f32 %v1614, %v1624
    %v1627 = vmul.f32 %v1625, %v1625
    %v1628 = vmul.f32 %v1626, %v1626
    %v1629 = vadd.f32 %v1627, %v1628
    %1630 = vadd.xlane.f32.xlu0 %v1629
    %v1631 = vpop.xlane.xlu0 %1630
    %v1632 = vmul.f32 %v1631, %v1623
    %v1633 = vadd.f32 %v1632, 1e-05
    %v1634 = vrsqrt.pop %v1633
    %v1635 = vmul.f32 %v1625, %v1634
    %v1636 = vmul.f32 %v1626, %v1634
    %v1638 = vlaneseq
    %v1639 = vshrl.u32 %v1638, 7
    %v1640 = vsub.s32 0, %v1639
    %v1641 = vrot.slane %v1617, %v1640
    %v1642 = vlaneseq
    %v1643 = vshrl.u32 %v1642, 7
    %v1644 = vsub.s32 1, %v1643
    %v1645 = vrot.slane %v1617, %v1644
    %v1648 = vmul.f32 %v1635, %v1641
    %v1649 = vmul.f32 %v1636, %v1645
    %v1651 = vlaneseq
    %v1652 = vshrl.u32 %v1651, 7
    %v1653 = vsub.s32 0, %v1652
    %v1654 = vrot.slane %v1619, %v1653
    %v1655 = vlaneseq
    %v1656 = vshrl.u32 %v1655, 7
    %v1657 = vsub.s32 1, %v1656
    %v1658 = vrot.slane %v1619, %v1657
    %v1661 = vadd.f32 %v1648, %v1654
    %v1662 = vadd.f32 %v1649, %v1658
    %1663 = vst [vmem:[#allocation2] sm:$0xff] %v1661
    %1664 = vst [vmem:[#allocation2 + $0x8] sm:$0xff] %v1662
    // Predicated region
    $region78: #{tpu_custom_call.1} parent=1 // pred_check
      _
    $region79: #{tpu_custom_call.1} parent=1 // pred_check_branch
      %1666 = sbr.rel (0) target = $region81
    $region80: #{tpu_custom_call.1} parent=1 // pred_region
      %s1668 = ssub.s32 256, 256
      %1669 = vsyncadd [#allocation3], %s1668
      %s1671 = sshll.u32 [#allocation2], 4
      %s1672 = int_to_ptr.vmem [resolvable:$true] %s1671
      %1674 = dma.vmem_to_hbm [thread:$0]  %s1672, 256, %s19, [#allocation3]
    $region81: #{tpu_custom_call.1} parent=1 // pred_fallthru
      _
    // Predicated region
    $region82: #{tpu_custom_call.1} parent=1 // pred_check
      _
    $region83: #{tpu_custom_call.1} parent=1 // pred_check_branch
      %1676 = sbr.rel (0) target = $region85
    $region84: #{tpu_custom_call.1} parent=1 // pred_region
      %s1678 = ssub.s32 128, 128
      %1679 = vsyncadd [#allocation5], %s1678
      %s1681 = sshll.u32 [#allocation4], 4
      %s1682 = int_to_ptr.vmem [resolvable:$true] %s1681
      %1684 = dma.vmem_to_hbm [thread:$0]  %s1682, 128, %s20, [#allocation5]
    $region85: #{tpu_custom_call.1} parent=1 // pred_fallthru
      _
    // Predicated region
    $region86: #{tpu_custom_call.1} parent=1 // pred_check
      _
    $region87: #{tpu_custom_call.1} parent=1 // pred_check_branch
      %1686 = sbr.rel (0) target = $region89
    $region88: #{tpu_custom_call.1} parent=1 // pred_region
      %1687 = dma.done [#allocation3], 256
    $region89: #{tpu_custom_call.1} parent=1 // pred_fallthru
      _
    // Predicated region
    $region90: #{tpu_custom_call.1} parent=1 // pred_check
      _
    $region91: #{tpu_custom_call.1} parent=1 // pred_check_branch
      %1689 = sbr.rel (0) target = $region93
    $region92: #{tpu_custom_call.1} parent=1 // pred_region
      %1690 = dma.done [#allocation5], 128
    $region93: #{tpu_custom_call.1} parent=1 // pred_fallthru
      _
    %1691 = vsyncpa [#allocation3], 1
    %1692 = vsyncpa [#allocation5], 1

</llo_original>
